<compile_context>
chip_gen: v5e
topology: v5e:2x2
jax: 0.10.0
libtpu: 0.0.40
codegen_flags: <defaults>
</compile_context>

<pallas_src>
import math
from functools import partial

import jax
import jax.numpy as jnp
from jax.experimental import pallas as pl
from jax.experimental.pallas import tpu as pltpu


def _mha_kernel(*refs, n_heads, has_mask, approx_recip):
    if has_mask:
        (q_ref, k_ref, v_ref, mask_ref,
         wqkv_ref, bqkv_ref, wo_ref, bo_ref, out_ref, o_scr) = refs
    else:
        (q_ref, k_ref, v_ref,
         wqkv_ref, bqkv_ref, wo_ref, bo_ref, out_ref, o_scr) = refs
        mask_ref = None

    # Block shapes:
    #   q_ref/k_ref/v_ref : (Bt, S, U)        bf16
    #   mask_ref          : (Bt or 1, S, S)   raw mask (0 = masked)
    #   wqkv_ref          : (3, U, U)         bf16, pre-transposed (x @ w == x @ W.T)
    #   bqkv_ref          : (3, 1, U)         f32 (Q bias pre-scaled by 1/sqrt(d_k))
    #   wo_ref            : (U, U)            bf16, pre-transposed
    #   bo_ref            : (1, U)            f32
    #   out_ref           : (Bt, S, U)
    #   o_scr             : (Bt, S, U)        bf16 VMEM scratch (staged head outputs)
    Bt, S, U = q_ref.shape
    d_k = U // n_heads

    # --- Q/K/V projections: one big K=U matmul each, cast straight to bf16 ---
    q2 = q_ref[...].reshape(Bt * S, U)
    k2 = k_ref[...].reshape(Bt * S, U)
    v2 = v_ref[...].reshape(Bt * S, U)

    q_eb = (jnp.dot(q2, wqkv_ref[0], preferred_element_type=jnp.float32)
            + bqkv_ref[0]).astype(jnp.bfloat16).reshape(Bt, S, U)
    k_eb = (jnp.dot(k2, wqkv_ref[1], preferred_element_type=jnp.float32)
            + bqkv_ref[1]).astype(jnp.bfloat16).reshape(Bt, S, U)
    v_eb = (jnp.dot(v2, wqkv_ref[2], preferred_element_type=jnp.float32)
            + bqkv_ref[2]).astype(jnp.bfloat16).reshape(Bt, S, U)

    if has_mask:
        # Hoisted out of the head loop; broadcasts over Bt if mask is (1, S, S).
        mask_is_zero = (mask_ref[...] == 0)
    neg_big = jnp.float32(-1e9)

    # --- per-head attention, batched over the whole batch block ---
    for h in range(n_heads):
        c0 = h * d_k
        q_h = q_eb[:, :, c0:c0 + d_k]              # (Bt, S, d_k) bf16
        k_h = k_eb[:, :, c0:c0 + d_k]
        v_h = v_eb[:, :, c0:c0 + d_k]

        # scores = q_h @ k_h.T (NT dot, MXU), f32 accumulation. 1/sqrt(d_k) was
        # folded into the Q projection weights.
        s = jnp.einsum('bqd,bkd->bqk', q_h, k_h,
                       preferred_element_type=jnp.float32)     # (Bt, S, S)
        if has_mask:
            s = jnp.where(mask_is_zero, neg_big, s)            # masked_fill(mask==0)

        # Numerically-stable softmax over the last axis (f32 math).
        m = jnp.max(s, axis=-1, keepdims=True)
        p = jnp.exp(s - m)
        l = jnp.sum(p, axis=-1, keepdims=True)
        if approx_recip:
            attn = p * pl.reciprocal(l, approx=True)
        else:
            attn = p / l

        # Dropout on attn would go here (eval mode -> identity).

        # Weighted values: (Bt, S, d_k); stage into the (Bt, S, U) scratch at the
        # head's lane offset so the output projection can run as a single K=U dot.
        o_h = jnp.einsum('bqk,bkd->bqd', attn.astype(jnp.bfloat16), v_h,
                         preferred_element_type=jnp.float32)
        o_scr[:, :, c0:c0 + d_k] = o_h.astype(jnp.bfloat16)

    # --- single output projection over all rows with full contraction K = U ---
    o2 = o_scr[...].reshape(Bt * S, U)
    out = jnp.dot(o2, wo_ref[...], preferred_element_type=jnp.float32) + bo_ref[...]
    out_ref[...] = out.reshape(Bt, S, U).astype(out_ref.dtype)


def _block_vmem_bytes(block_b, S, U, mask_rows_batch, mask_itemsize,
                      out_itemsize, has_mask):
    """Estimate of VMEM live per grid step (blocks + in-kernel intermediates)."""
    act = block_b * S * U
    nbytes = 3 * act * 2 * 2                       # q/k/v bf16 blocks, double-buffered
    if has_mask:
        nbytes += mask_rows_batch * S * S * mask_itemsize * 2   # mask block (2 bufs)
    nbytes += act * out_itemsize * 2               # output block, double-buffered
    nbytes += act * 2                              # o_scr bf16 head-staging scratch
    nbytes += 3 * act * 4                          # f32 projection results (pre-cast)
    nbytes += 3 * act * 2                          # bf16 q_eb / k_eb / v_eb
    nbytes += 3 * block_b * S * S * 4              # score / exp / attn f32 temporaries
    nbytes += 2 * act * 4                          # per-head o_h f32 + final f32 out
    nbytes += 4 * U * U * 2 + 4 * U * 4            # weights (single-buffered) + biases
    return nbytes


def multi_headed_attention(query, key, value, mask, params, n_heads,
                           block_b=None, out_dtype=jnp.float32,
                           approx_reciprocal=True):
    """params = dict with wq,bq,wk,bk,wv,bv,wo,bo (nn.Linear layout)."""
    B, S, U = query.shape
    assert U % n_heads == 0
    d_k = U // n_heads
    scale = 1.0 / math.sqrt(float(d_k))

    # --- mask handling: pass the raw mask, select in-kernel (no wrapper bias pass) ---
    has_mask = mask is not None
    if has_mask:
        mask_arr = mask
        if mask_arr.dtype == jnp.bool_:
            mask_arr = mask_arr.astype(jnp.int32)
        if mask_arr.ndim == 2:
            mask_arr = mask_arr[None]
        assert mask_arr.shape[-2:] == (S, S)
        mask_batched = mask_arr.shape[0] != 1
        if mask_batched:
            assert mask_arr.shape[0] == B
        mask_itemsize = jnp.dtype(mask_arr.dtype).itemsize
    else:
        mask_arr = None
        mask_batched = False
        mask_itemsize = 0

    out_itemsize = jnp.dtype(out_dtype).itemsize

    # --- generation-aware VMEM budget ---
    try:
        vmem_cap = int(pltpu.get_tpu_info().vmem_capacity_bytes)
    except Exception:
        vmem_cap = 64 * 1024 * 1024                # conservative fallback
    if vmem_cap <= 64 * 1024 * 1024:
        vmem_cap_limit = 48 * 1024 * 1024          # v7x-class: never request all 64 MiB
    else:
        vmem_cap_limit = 100 * 1024 * 1024         # v5e/v6e: 128 MiB physical
    sizing_budget = vmem_cap_limit // 2            # headroom for compiler scratch

    def blk_bytes(bb):
        mrows = bb if mask_batched else 1
        return _block_vmem_bytes(bb, S, U, mrows, mask_itemsize,
                                 out_itemsize, has_mask)

    if block_b is None:
        # Keep >= 2 grid steps when B > 1 so both v7x TensorCores get work.
        max_bb = B if B == 1 else max(1, B // 2)
        block_b = 1
        for cand in range(max_bb, 0, -1):
            if B % cand == 0 and blk_bytes(cand) <= sizing_budget:
                block_b = cand
                break
    assert B % block_b == 0
    n_blocks = B // block_b

    vmem_limit = int(min(vmem_cap_limit,
                         int(1.5 * blk_bytes(block_b)) + (16 << 20)))

    # --- weights: pre-transposed bf16, 1/sqrt(d_k) folded into Q, single stack ---
    wq_t = (params['wq'].T * scale).astype(jnp.bfloat16)
    wk_t = params['wk'].T.astype(jnp.bfloat16)
    wv_t = params['wv'].T.astype(jnp.bfloat16)
    wqkv_t = jnp.stack([wq_t, wk_t, wv_t], axis=0)                  # (3, U, U)
    wo_t = params['wo'].T.astype(jnp.bfloat16)                      # (U, U)

    bqkv = jnp.stack([params['bq'] * scale, params['bk'], params['bv']],
                     axis=0).reshape(3, 1, U).astype(jnp.float32)   # (3, 1, U)
    bo = params['bo'].reshape(1, U).astype(jnp.float32)             # (1, U)

    # bf16 activations (f32 accumulation inside the kernel).
    q_b = query.astype(jnp.bfloat16)
    k_b = key.astype(jnp.bfloat16)
    v_b = value.astype(jnp.bfloat16)

    kernel = partial(_mha_kernel, n_heads=n_heads, has_mask=has_mask,
                     approx_recip=approx_reciprocal)

    def _build_and_run(single_buffer_weights):
        def batched_spec(shape):
            return pl.BlockSpec(shape, lambda bb: (bb, 0, 0))

        def const_spec(shape):
            ndim = len(shape)
            index_map = (lambda bb: (0, 0, 0)) if ndim == 3 else (lambda bb: (0, 0))
            if single_buffer_weights:
                try:
                    return pl.BlockSpec(shape, index_map,
                                        pipeline_mode=pl.Buffered(1))
                except TypeError:
                    return pl.BlockSpec(shape, index_map)
            return pl.BlockSpec(shape, index_map)

        in_specs = [
            batched_spec((block_b, S, U)),      # query (bf16)
            batched_spec((block_b, S, U)),      # key   (bf16)
            batched_spec((block_b, S, U)),      # value (bf16)
        ]
        inputs = [q_b, k_b, v_b]
        if has_mask:
            if mask_batched:
                in_specs.append(batched_spec((block_b, S, S)))
            else:
                in_specs.append(const_spec((1, S, S)))
            inputs.append(mask_arr)
        in_specs += [
            const_spec((3, U, U)),              # stacked Wq/Wk/Wv (pre-T, bf16)
            const_spec((3, 1, U)),              # stacked biases (f32)
            const_spec((U, U)),                 # Wo (pre-T, bf16)
            const_spec((1, U)),                 # bo (f32)
        ]
        inputs += [wqkv_t, bqkv, wo_t, bo]

        return pl.pallas_call(
            kernel,
            out_shape=jax.ShapeDtypeStruct((B, S, U), out_dtype),
            grid_spec=pltpu.PrefetchScalarGridSpec(
                num_scalar_prefetch=0,
                grid=(n_blocks,),
                in_specs=in_specs,
                out_specs=batched_spec((block_b, S, U)),
                scratch_shapes=[pltpu.VMEM((block_b, S, U), jnp.bfloat16)],
            ),
            compiler_params=pltpu.CompilerParams(
                dimension_semantics=("parallel",),
                vmem_limit_bytes=vmem_limit),
        )(*inputs)

    try:
        return _build_and_run(single_buffer_weights=True)
    except Exception:
        # Fallback if single-buffered (Buffered(1)) weight specs are rejected.
        return _build_and_run(single_buffer_weights=False)


def multi_headed_attention_ref(query, key, value, mask, params, n_heads):
    """Pure-JAX f32 reference mirroring the PyTorch forward (eval mode)."""
    B, S, U = query.shape
    d_k = U // n_heads

    def lin(x, w, b):
        return x @ w.T + b

    def split(x):  # (B,S,U) -> (B,H,S,dk)
        return x.reshape(B, S, n_heads, d_k).transpose(0, 2, 1, 3)

    q = split(lin(query, params['wq'], params['bq']))
    k = split(lin(key, params['wk'], params['bk']))
    v = split(lin(value, params['wv'], params['bv']))

    scores = jnp.einsum('bhqd,bhkd->bhqk', q, k) / jnp.sqrt(jnp.float32(d_k))
    if mask is not None:
        scores = jnp.where(mask[:, None, :, :] == 0, -1e9, scores)
    attn = jax.nn.softmax(scores, axis=-1)
    o = jnp.einsum('bhqk,bhkd->bhqd', attn, v)
    o = o.transpose(0, 2, 1, 3).reshape(B, S, U)
    return lin(o, params['wo'], params['bo'])


def init_params(key, n_units):
    """weights ~ U(-ki, ki), ki = sqrt(1/n_units) (matches the module init)."""
    ki = math.sqrt(1.0 / n_units)
    names = ['wq', 'bq', 'wk', 'bk', 'wv', 'bv', 'wo', 'bo']
    keys = jax.random.split(key, len(names))
    params = {}
    for name, k in zip(names, keys):
        shape = (n_units, n_units) if name.startswith('w') else (n_units,)
        params[name] = jax.random.uniform(k, shape, jnp.float32, -ki, ki)
    return params


if __name__ == "__main__":
    B, S, n_heads, n_units = 2, 8, 4, 32

    root = jax.random.PRNGKey(0)
    k_q, k_k, k_v, k_p = jax.random.split(root, 4)

    query = jax.random.normal(k_q, (B, S, n_units), jnp.float32)
    key_in = jax.random.normal(k_k, (B, S, n_units), jnp.float32)
    value = jax.random.normal(k_v, (B, S, n_units), jnp.float32)
    # Causal mask (1 = keep, 0 = masked), same for every batch element.
    mask = jnp.broadcast_to(
        jnp.tril(jnp.ones((S, S), jnp.float32)), (B, S, S))

    params = init_params(k_p, n_units)

    out = multi_headed_attention(query, key_in, value, mask, params, n_heads)
    out = jax.block_until_ready(out)

    ref = multi_headed_attention_ref(query, key_in, value, mask, params, n_heads)
    assert out.shape == (B, S, n_units)
    # bf16 matmul operands (f32 accumulation) -> looser tolerance vs f32 reference.
    assert jnp.allclose(out, ref, atol=5e-2, rtol=5e-2), "mismatch vs reference"

    print("KERNEL_OK")
</pallas_src>

<mosaic_0001>
module attributes {stable_mosaic.version = 11 : i64} {
  func.func @_mha_kernel(%arg0: i32, %arg1: memref<1x8x32xbf16, #tpu.memory_space<vmem>>, %arg2: memref<1x8x32xbf16, #tpu.memory_space<vmem>>, %arg3: memref<1x8x32xbf16, #tpu.memory_space<vmem>>, %arg4: memref<1x8x8xf32, #tpu.memory_space<vmem>>, %arg5: memref<3x32x32xbf16, #tpu.memory_space<vmem>>, %arg6: memref<3x1x32xf32, #tpu.memory_space<vmem>>, %arg7: memref<32x32xbf16, #tpu.memory_space<vmem>>, %arg8: memref<1x32xf32, #tpu.memory_space<vmem>>, %arg9: memref<1x8x32xf32, #tpu.memory_space<vmem>>, %arg10: memref<1x8x32xbf16, #tpu.memory_space<vmem>>) attributes {dimension_semantics = [#tpu.dimension_semantics<parallel>], iteration_bounds = array<i64: 2>, scalar_prefetch = 0 : i64, scratch_operands = 1 : i64, tpu.core_type = #tpu.core_type<tc>, window_params = [{transform_indices = @transform_0, window_bounds = array<i64: 1, 8, 32>}, {transform_indices = @transform_1, window_bounds = array<i64: 1, 8, 32>}, {transform_indices = @transform_2, window_bounds = array<i64: 1, 8, 32>}, {transform_indices = @transform_3, window_bounds = array<i64: 1, 8, 8>}, {pipeline_mode = #tpu.pipeline_mode<synchronous>, transform_indices = @transform_4, window_bounds = array<i64: 3, 32, 32>}, {pipeline_mode = #tpu.pipeline_mode<synchronous>, transform_indices = @transform_5, window_bounds = array<i64: 3, 1, 32>}, {pipeline_mode = #tpu.pipeline_mode<synchronous>, transform_indices = @transform_6, window_bounds = array<i64: 32, 32>}, {pipeline_mode = #tpu.pipeline_mode<synchronous>, transform_indices = @transform_7, window_bounds = array<i64: 1, 32>}, {transform_indices = @transform_8, window_bounds = array<i64: 1, 8, 32>}]} {
    %c0 = arith.constant 0 : index
    %c0_0 = arith.constant 0 : index
    %c0_1 = arith.constant 0 : index
    %0 = vector.load %arg1[%c0, %c0_0, %c0_1] : memref<1x8x32xbf16, #tpu.memory_space<vmem>>, vector<1x8x32xbf16>
    %1 = vector.shape_cast %0 : vector<1x8x32xbf16> to vector<8x32xbf16>
    %c0_2 = arith.constant 0 : index
    %c0_3 = arith.constant 0 : index
    %c0_4 = arith.constant 0 : index
    %2 = vector.load %arg2[%c0_2, %c0_3, %c0_4] : memref<1x8x32xbf16, #tpu.memory_space<vmem>>, vector<1x8x32xbf16>
    %3 = vector.shape_cast %2 : vector<1x8x32xbf16> to vector<8x32xbf16>
    %c0_5 = arith.constant 0 : index
    %c0_6 = arith.constant 0 : index
    %c0_7 = arith.constant 0 : index
    %4 = vector.load %arg3[%c0_5, %c0_6, %c0_7] : memref<1x8x32xbf16, #tpu.memory_space<vmem>>, vector<1x8x32xbf16>
    %5 = vector.shape_cast %4 : vector<1x8x32xbf16> to vector<8x32xbf16>
    %c0_8 = arith.constant 0 : index
    %c0_9 = arith.constant 0 : index
    %c0_10 = arith.constant 0 : index
    %6 = vector.load %arg5[%c0_8, %c0_9, %c0_10] : memref<3x32x32xbf16, #tpu.memory_space<vmem>>, vector<1x32x32xbf16>
    %7 = vector.shape_cast %6 : vector<1x32x32xbf16> to vector<32x32xbf16>
    %cst = arith.constant dense<0.000000e+00> : vector<8x32xf32>
    %8 = tpu.matmul %1, %7, %cst {dimension_numbers = #tpu.dot_dimension_numbers<[1], [0], [0], [1], [0, 0, 1, 1], [], []>} : vector<8x32xbf16>, vector<32x32xbf16>, vector<8x32xf32> -> vector<8x32xf32>
    %c0_11 = arith.constant 0 : index
    %c0_12 = arith.constant 0 : index
    %c0_13 = arith.constant 0 : index
    %9 = vector.load %arg6[%c0_11, %c0_12, %c0_13] : memref<3x1x32xf32, #tpu.memory_space<vmem>>, vector<1x1x32xf32>
    %10 = vector.shape_cast %9 : vector<1x1x32xf32> to vector<1x32xf32>
    %11 = vector.broadcast %10 : vector<1x32xf32> to vector<8x32xf32>
    %12 = arith.addf %8, %11 : vector<8x32xf32>
    %13 = arith.truncf %12 : vector<8x32xf32> to vector<8x32xbf16>
    %14 = vector.shape_cast %13 : vector<8x32xbf16> to vector<1x8x32xbf16>
    %c1 = arith.constant 1 : index
    %c0_14 = arith.constant 0 : index
    %c0_15 = arith.constant 0 : index
    %15 = vector.load %arg5[%c1, %c0_14, %c0_15] : memref<3x32x32xbf16, #tpu.memory_space<vmem>>, vector<1x32x32xbf16>
    %16 = vector.shape_cast %15 : vector<1x32x32xbf16> to vector<32x32xbf16>
    %cst_16 = arith.constant dense<0.000000e+00> : vector<8x32xf32>
    %17 = tpu.matmul %3, %16, %cst_16 {dimension_numbers = #tpu.dot_dimension_numbers<[1], [0], [0], [1], [0, 0, 1, 1], [], []>} : vector<8x32xbf16>, vector<32x32xbf16>, vector<8x32xf32> -> vector<8x32xf32>
    %c1_17 = arith.constant 1 : index
    %c0_18 = arith.constant 0 : index
    %c0_19 = arith.constant 0 : index
    %18 = vector.load %arg6[%c1_17, %c0_18, %c0_19] : memref<3x1x32xf32, #tpu.memory_space<vmem>>, vector<1x1x32xf32>
    %19 = vector.shape_cast %18 : vector<1x1x32xf32> to vector<1x32xf32>
    %20 = vector.broadcast %19 : vector<1x32xf32> to vector<8x32xf32>
    %21 = arith.addf %17, %20 : vector<8x32xf32>
    %22 = arith.truncf %21 : vector<8x32xf32> to vector<8x32xbf16>
    %23 = vector.shape_cast %22 : vector<8x32xbf16> to vector<1x8x32xbf16>
    %c2 = arith.constant 2 : index
    %c0_20 = arith.constant 0 : index
    %c0_21 = arith.constant 0 : index
    %24 = vector.load %arg5[%c2, %c0_20, %c0_21] : memref<3x32x32xbf16, #tpu.memory_space<vmem>>, vector<1x32x32xbf16>
    %25 = vector.shape_cast %24 : vector<1x32x32xbf16> to vector<32x32xbf16>
    %cst_22 = arith.constant dense<0.000000e+00> : vector<8x32xf32>
    %26 = tpu.matmul %5, %25, %cst_22 {dimension_numbers = #tpu.dot_dimension_numbers<[1], [0], [0], [1], [0, 0, 1, 1], [], []>} : vector<8x32xbf16>, vector<32x32xbf16>, vector<8x32xf32> -> vector<8x32xf32>
    %c2_23 = arith.constant 2 : index
    %c0_24 = arith.constant 0 : index
    %c0_25 = arith.constant 0 : index
    %27 = vector.load %arg6[%c2_23, %c0_24, %c0_25] : memref<3x1x32xf32, #tpu.memory_space<vmem>>, vector<1x1x32xf32>
    %28 = vector.shape_cast %27 : vector<1x1x32xf32> to vector<1x32xf32>
    %29 = vector.broadcast %28 : vector<1x32xf32> to vector<8x32xf32>
    %30 = arith.addf %26, %29 : vector<8x32xf32>
    %31 = arith.truncf %30 : vector<8x32xf32> to vector<8x32xbf16>
    %32 = vector.shape_cast %31 : vector<8x32xbf16> to vector<1x8x32xbf16>
    %c0_26 = arith.constant 0 : index
    %c0_27 = arith.constant 0 : index
    %c0_28 = arith.constant 0 : index
    %33 = vector.load %arg4[%c0_26, %c0_27, %c0_28] : memref<1x8x8xf32, #tpu.memory_space<vmem>>, vector<1x8x8xf32>
    %cst_29 = arith.constant 0.000000e+00 : f32
    %34 = vector.broadcast %cst_29 : f32 to vector<1x8x8xf32>
    %35 = arith.cmpf oeq, %33, %34 : vector<1x8x8xf32>
    %36 = vector.extract_strided_slice %14 {offsets = [0, 0, 0], sizes = [1, 8, 8], strides = [1, 1, 1]} : vector<1x8x32xbf16> to vector<1x8x8xbf16>
    %37 = vector.extract_strided_slice %23 {offsets = [0, 0, 0], sizes = [1, 8, 8], strides = [1, 1, 1]} : vector<1x8x32xbf16> to vector<1x8x8xbf16>
    %38 = vector.extract_strided_slice %32 {offsets = [0, 0, 0], sizes = [1, 8, 8], strides = [1, 1, 1]} : vector<1x8x32xbf16> to vector<1x8x8xbf16>
    "tpu.trace_start"() <{level = 10 : i32, message = "bqd,bkd->bqk"}> : () -> ()
    %cst_30 = arith.constant dense<0.000000e+00> : vector<1x8x8xf32>
    %39 = tpu.matmul %36, %37, %cst_30 {dimension_numbers = #tpu.dot_dimension_numbers<[2], [2], [1], [1], [0, 0, 0, 1, 1, 1], [0], [0]>} : vector<1x8x8xbf16>, vector<1x8x8xbf16>, vector<1x8x8xf32> -> vector<1x8x8xf32>
    %cst_31 = arith.constant -1.000000e+09 : f32
    "tpu.trace_stop"() : () -> ()
    %40 = vector.broadcast %cst_31 : f32 to vector<1x8x8xf32>
    %41 = arith.select %35, %40, %39 : vector<1x8x8xi1>, vector<1x8x8xf32>
    %cst_32 = arith.constant dense<0xFF800000> : vector<1x8xf32>
    %42 = vector.multi_reduction <maximumf>, %41, %cst_32 [2] : vector<1x8x8xf32> to vector<1x8xf32>
    %43 = vector.shape_cast %42 : vector<1x8xf32> to vector<1x8x1xf32>
    %44 = vector.broadcast %43 : vector<1x8x1xf32> to vector<1x8x8xf32>
    %45 = arith.subf %41, %44 : vector<1x8x8xf32>
    %46 = math.exp %45 : vector<1x8x8xf32>
    %cst_33 = arith.constant dense<0.000000e+00> : vector<1x8xf32>
    %47 = vector.multi_reduction <add>, %46, %cst_33 [2] : vector<1x8x8xf32> to vector<1x8xf32>
    %48 = vector.shape_cast %47 : vector<1x8xf32> to vector<1x8x1xf32>
    %49 = tpu.reciprocal %48 {approx = true} : vector<1x8x1xf32> -> vector<1x8x1xf32>
    %50 = vector.broadcast %49 : vector<1x8x1xf32> to vector<1x8x8xf32>
    %51 = arith.mulf %46, %50 : vector<1x8x8xf32>
    %52 = arith.truncf %51 : vector<1x8x8xf32> to vector<1x8x8xbf16>
    "tpu.trace_start"() <{level = 10 : i32, message = "bqk,bkd->bqd"}> : () -> ()
    %cst_34 = arith.constant dense<0.000000e+00> : vector<1x8x8xf32>
    %53 = tpu.matmul %52, %38, %cst_34 {dimension_numbers = #tpu.dot_dimension_numbers<[2], [1], [1], [2], [0, 0, 0, 1, 1, 2], [0], [0]>} : vector<1x8x8xbf16>, vector<1x8x8xbf16>, vector<1x8x8xf32> -> vector<1x8x8xf32>
    "tpu.trace_stop"() : () -> ()
    %54 = arith.truncf %53 : vector<1x8x8xf32> to vector<1x8x8xbf16>
    %c0_35 = arith.constant 0 : index
    %c0_36 = arith.constant 0 : index
    %c0_37 = arith.constant 0 : index
    %55 = vector.load %arg10[%c0_35, %c0_36, %c0_37] : memref<1x8x32xbf16, #tpu.memory_space<vmem>>, vector<1x8x8xbf16>
    tpu.vector_store %arg10[%c0_35, %c0_36, %c0_37], %54 {strides = array<i32>} : memref<1x8x32xbf16, #tpu.memory_space<vmem>>, vector<1x8x8xbf16>,
    %56 = vector.extract_strided_slice %14 {offsets = [0, 0, 8], sizes = [1, 8, 8], strides = [1, 1, 1]} : vector<1x8x32xbf16> to vector<1x8x8xbf16>
    %57 = vector.extract_strided_slice %23 {offsets = [0, 0, 8], sizes = [1, 8, 8], strides = [1, 1, 1]} : vector<1x8x32xbf16> to vector<1x8x8xbf16>
    %58 = vector.extract_strided_slice %32 {offsets = [0, 0, 8], sizes = [1, 8, 8], strides = [1, 1, 1]} : vector<1x8x32xbf16> to vector<1x8x8xbf16>
    "tpu.trace_start"() <{level = 10 : i32, message = "bqd,bkd->bqk"}> : () -> ()
    %cst_38 = arith.constant dense<0.000000e+00> : vector<1x8x8xf32>
    %59 = tpu.matmul %56, %57, %cst_38 {dimension_numbers = #tpu.dot_dimension_numbers<[2], [2], [1], [1], [0, 0, 0, 1, 1, 1], [0], [0]>} : vector<1x8x8xbf16>, vector<1x8x8xbf16>, vector<1x8x8xf32> -> vector<1x8x8xf32>
    %cst_39 = arith.constant -1.000000e+09 : f32
    "tpu.trace_stop"() : () -> ()
    %60 = vector.broadcast %cst_39 : f32 to vector<1x8x8xf32>
    %61 = arith.select %35, %60, %59 : vector<1x8x8xi1>, vector<1x8x8xf32>
    %cst_40 = arith.constant dense<0xFF800000> : vector<1x8xf32>
    %62 = vector.multi_reduction <maximumf>, %61, %cst_40 [2] : vector<1x8x8xf32> to vector<1x8xf32>
    %63 = vector.shape_cast %62 : vector<1x8xf32> to vector<1x8x1xf32>
    %64 = vector.broadcast %63 : vector<1x8x1xf32> to vector<1x8x8xf32>
    %65 = arith.subf %61, %64 : vector<1x8x8xf32>
    %66 = math.exp %65 : vector<1x8x8xf32>
    %cst_41 = arith.constant dense<0.000000e+00> : vector<1x8xf32>
    %67 = vector.multi_reduction <add>, %66, %cst_41 [2] : vector<1x8x8xf32> to vector<1x8xf32>
    %68 = vector.shape_cast %67 : vector<1x8xf32> to vector<1x8x1xf32>
    %69 = tpu.reciprocal %68 {approx = true} : vector<1x8x1xf32> -> vector<1x8x1xf32>
    %70 = vector.broadcast %69 : vector<1x8x1xf32> to vector<1x8x8xf32>
    %71 = arith.mulf %66, %70 : vector<1x8x8xf32>
    %72 = arith.truncf %71 : vector<1x8x8xf32> to vector<1x8x8xbf16>
    "tpu.trace_start"() <{level = 10 : i32, message = "bqk,bkd->bqd"}> : () -> ()
    %cst_42 = arith.constant dense<0.000000e+00> : vector<1x8x8xf32>
    %73 = tpu.matmul %72, %58, %cst_42 {dimension_numbers = #tpu.dot_dimension_numbers<[2], [1], [1], [2], [0, 0, 0, 1, 1, 2], [0], [0]>} : vector<1x8x8xbf16>, vector<1x8x8xbf16>, vector<1x8x8xf32> -> vector<1x8x8xf32>
    "tpu.trace_stop"() : () -> ()
    %74 = arith.truncf %73 : vector<1x8x8xf32> to vector<1x8x8xbf16>
    %c0_43 = arith.constant 0 : index
    %c0_44 = arith.constant 0 : index
    %c8 = arith.constant 8 : index
    %75 = vector.load %arg10[%c0_43, %c0_44, %c8] : memref<1x8x32xbf16, #tpu.memory_space<vmem>>, vector<1x8x8xbf16>
    tpu.vector_store %arg10[%c0_43, %c0_44, %c8], %74 {strides = array<i32>} : memref<1x8x32xbf16, #tpu.memory_space<vmem>>, vector<1x8x8xbf16>,
    %76 = vector.extract_strided_slice %14 {offsets = [0, 0, 16], sizes = [1, 8, 8], strides = [1, 1, 1]} : vector<1x8x32xbf16> to vector<1x8x8xbf16>
    %77 = vector.extract_strided_slice %23 {offsets = [0, 0, 16], sizes = [1, 8, 8], strides = [1, 1, 1]} : vector<1x8x32xbf16> to vector<1x8x8xbf16>
    %78 = vector.extract_strided_slice %32 {offsets = [0, 0, 16], sizes = [1, 8, 8], strides = [1, 1, 1]} : vector<1x8x32xbf16> to vector<1x8x8xbf16>
    "tpu.trace_start"() <{level = 10 : i32, message = "bqd,bkd->bqk"}> : () -> ()
    %cst_45 = arith.constant dense<0.000000e+00> : vector<1x8x8xf32>
    %79 = tpu.matmul %76, %77, %cst_45 {dimension_numbers = #tpu.dot_dimension_numbers<[2], [2], [1], [1], [0, 0, 0, 1, 1, 1], [0], [0]>} : vector<1x8x8xbf16>, vector<1x8x8xbf16>, vector<1x8x8xf32> -> vector<1x8x8xf32>
    %cst_46 = arith.constant -1.000000e+09 : f32
    "tpu.trace_stop"() : () -> ()
    %80 = vector.broadcast %cst_46 : f32 to vector<1x8x8xf32>
    %81 = arith.select %35, %80, %79 : vector<1x8x8xi1>, vector<1x8x8xf32>
    %cst_47 = arith.constant dense<0xFF800000> : vector<1x8xf32>
    %82 = vector.multi_reduction <maximumf>, %81, %cst_47 [2] : vector<1x8x8xf32> to vector<1x8xf32>
    %83 = vector.shape_cast %82 : vector<1x8xf32> to vector<1x8x1xf32>
    %84 = vector.broadcast %83 : vector<1x8x1xf32> to vector<1x8x8xf32>
    %85 = arith.subf %81, %84 : vector<1x8x8xf32>
    %86 = math.exp %85 : vector<1x8x8xf32>
    %cst_48 = arith.constant dense<0.000000e+00> : vector<1x8xf32>
    %87 = vector.multi_reduction <add>, %86, %cst_48 [2] : vector<1x8x8xf32> to vector<1x8xf32>
    %88 = vector.shape_cast %87 : vector<1x8xf32> to vector<1x8x1xf32>
    %89 = tpu.reciprocal %88 {approx = true} : vector<1x8x1xf32> -> vector<1x8x1xf32>
    %90 = vector.broadcast %89 : vector<1x8x1xf32> to vector<1x8x8xf32>
    %91 = arith.mulf %86, %90 : vector<1x8x8xf32>
    %92 = arith.truncf %91 : vector<1x8x8xf32> to vector<1x8x8xbf16>
    "tpu.trace_start"() <{level = 10 : i32, message = "bqk,bkd->bqd"}> : () -> ()
    %cst_49 = arith.constant dense<0.000000e+00> : vector<1x8x8xf32>
    %93 = tpu.matmul %92, %78, %cst_49 {dimension_numbers = #tpu.dot_dimension_numbers<[2], [1], [1], [2], [0, 0, 0, 1, 1, 2], [0], [0]>} : vector<1x8x8xbf16>, vector<1x8x8xbf16>, vector<1x8x8xf32> -> vector<1x8x8xf32>
    "tpu.trace_stop"() : () -> ()
    %94 = arith.truncf %93 : vector<1x8x8xf32> to vector<1x8x8xbf16>
    %c0_50 = arith.constant 0 : index
    %c0_51 = arith.constant 0 : index
    %c16 = arith.constant 16 : index
    %95 = vector.load %arg10[%c0_50, %c0_51, %c16] : memref<1x8x32xbf16, #tpu.memory_space<vmem>>, vector<1x8x8xbf16>
    tpu.vector_store %arg10[%c0_50, %c0_51, %c16], %94 {strides = array<i32>} : memref<1x8x32xbf16, #tpu.memory_space<vmem>>, vector<1x8x8xbf16>,
    %96 = vector.extract_strided_slice %14 {offsets = [0, 0, 24], sizes = [1, 8, 8], strides = [1, 1, 1]} : vector<1x8x32xbf16> to vector<1x8x8xbf16>
    %97 = vector.extract_strided_slice %23 {offsets = [0, 0, 24], sizes = [1, 8, 8], strides = [1, 1, 1]} : vector<1x8x32xbf16> to vector<1x8x8xbf16>
    %98 = vector.extract_strided_slice %32 {offsets = [0, 0, 24], sizes = [1, 8, 8], strides = [1, 1, 1]} : vector<1x8x32xbf16> to vector<1x8x8xbf16>
    "tpu.trace_start"() <{level = 10 : i32, message = "bqd,bkd->bqk"}> : () -> ()
    %cst_52 = arith.constant dense<0.000000e+00> : vector<1x8x8xf32>
    %99 = tpu.matmul %96, %97, %cst_52 {dimension_numbers = #tpu.dot_dimension_numbers<[2], [2], [1], [1], [0, 0, 0, 1, 1, 1], [0], [0]>} : vector<1x8x8xbf16>, vector<1x8x8xbf16>, vector<1x8x8xf32> -> vector<1x8x8xf32>
    %cst_53 = arith.constant -1.000000e+09 : f32
    "tpu.trace_stop"() : () -> ()
    %100 = vector.broadcast %cst_53 : f32 to vector<1x8x8xf32>
    %101 = arith.select %35, %100, %99 : vector<1x8x8xi1>, vector<1x8x8xf32>
    %cst_54 = arith.constant dense<0xFF800000> : vector<1x8xf32>
    %102 = vector.multi_reduction <maximumf>, %101, %cst_54 [2] : vector<1x8x8xf32> to vector<1x8xf32>
    %103 = vector.shape_cast %102 : vector<1x8xf32> to vector<1x8x1xf32>
    %104 = vector.broadcast %103 : vector<1x8x1xf32> to vector<1x8x8xf32>
    %105 = arith.subf %101, %104 : vector<1x8x8xf32>
    %106 = math.exp %105 : vector<1x8x8xf32>
    %cst_55 = arith.constant dense<0.000000e+00> : vector<1x8xf32>
    %107 = vector.multi_reduction <add>, %106, %cst_55 [2] : vector<1x8x8xf32> to vector<1x8xf32>
    %108 = vector.shape_cast %107 : vector<1x8xf32> to vector<1x8x1xf32>
    %109 = tpu.reciprocal %108 {approx = true} : vector<1x8x1xf32> -> vector<1x8x1xf32>
    %110 = vector.broadcast %109 : vector<1x8x1xf32> to vector<1x8x8xf32>
    %111 = arith.mulf %106, %110 : vector<1x8x8xf32>
    %112 = arith.truncf %111 : vector<1x8x8xf32> to vector<1x8x8xbf16>
    "tpu.trace_start"() <{level = 10 : i32, message = "bqk,bkd->bqd"}> : () -> ()
    %cst_56 = arith.constant dense<0.000000e+00> : vector<1x8x8xf32>
    %113 = tpu.matmul %112, %98, %cst_56 {dimension_numbers = #tpu.dot_dimension_numbers<[2], [1], [1], [2], [0, 0, 0, 1, 1, 2], [0], [0]>} : vector<1x8x8xbf16>, vector<1x8x8xbf16>, vector<1x8x8xf32> -> vector<1x8x8xf32>
    "tpu.trace_stop"() : () -> ()
    %114 = arith.truncf %113 : vector<1x8x8xf32> to vector<1x8x8xbf16>
    %c0_57 = arith.constant 0 : index
    %c0_58 = arith.constant 0 : index
    %c24 = arith.constant 24 : index
    %115 = vector.load %arg10[%c0_57, %c0_58, %c24] : memref<1x8x32xbf16, #tpu.memory_space<vmem>>, vector<1x8x8xbf16>
    tpu.vector_store %arg10[%c0_57, %c0_58, %c24], %114 {strides = array<i32>} : memref<1x8x32xbf16, #tpu.memory_space<vmem>>, vector<1x8x8xbf16>,
    %c0_59 = arith.constant 0 : index
    %c0_60 = arith.constant 0 : index
    %c0_61 = arith.constant 0 : index
    %116 = vector.load %arg10[%c0_59, %c0_60, %c0_61] : memref<1x8x32xbf16, #tpu.memory_space<vmem>>, vector<1x8x32xbf16>
    %117 = vector.shape_cast %116 : vector<1x8x32xbf16> to vector<8x32xbf16>
    %c0_62 = arith.constant 0 : index
    %c0_63 = arith.constant 0 : index
    %118 = vector.load %arg7[%c0_62, %c0_63] : memref<32x32xbf16, #tpu.memory_space<vmem>>, vector<32x32xbf16>
    %cst_64 = arith.constant dense<0.000000e+00> : vector<8x32xf32>
    %119 = tpu.matmul %117, %118, %cst_64 {dimension_numbers = #tpu.dot_dimension_numbers<[1], [0], [0], [1], [0, 0, 1, 1], [], []>} : vector<8x32xbf16>, vector<32x32xbf16>, vector<8x32xf32> -> vector<8x32xf32>
    %c0_65 = arith.constant 0 : index
    %c0_66 = arith.constant 0 : index
    %120 = vector.load %arg8[%c0_65, %c0_66] : memref<1x32xf32, #tpu.memory_space<vmem>>, vector<1x32xf32>
    %121 = vector.broadcast %120 : vector<1x32xf32> to vector<8x32xf32>
    %122 = arith.addf %119, %121 : vector<8x32xf32>
    %123 = vector.shape_cast %122 : vector<8x32xf32> to vector<1x8x32xf32>
    %c0_67 = arith.constant 0 : index
    %c0_68 = arith.constant 0 : index
    %c0_69 = arith.constant 0 : index
    %124 = vector.load %arg9[%c0_67, %c0_68, %c0_69] : memref<1x8x32xf32, #tpu.memory_space<vmem>>, vector<1x8x32xf32>
    tpu.vector_store %arg9[%c0_67, %c0_68, %c0_69], %123 {strides = array<i32>} : memref<1x8x32xf32, #tpu.memory_space<vmem>>, vector<1x8x32xf32>,
    return
  }
  func.func @transform_0(%arg0: i32) -> (i32, i32, i32) {
    %c0_i32 = arith.constant 0 : i32
    %c0_i32_0 = arith.constant 0 : i32
    %c0_i32_1 = arith.constant 0 : i32
    return %arg0, %c0_i32, %c0_i32_0 : i32, i32, i32
  }
  func.func @transform_1(%arg0: i32) -> (i32, i32, i32) {
    %c0_i32 = arith.constant 0 : i32
    %c0_i32_0 = arith.constant 0 : i32
    %c0_i32_1 = arith.constant 0 : i32
    return %arg0, %c0_i32, %c0_i32_0 : i32, i32, i32
  }
  func.func @transform_2(%arg0: i32) -> (i32, i32, i32) {
    %c0_i32 = arith.constant 0 : i32
    %c0_i32_0 = arith.constant 0 : i32
    %c0_i32_1 = arith.constant 0 : i32
    return %arg0, %c0_i32, %c0_i32_0 : i32, i32, i32
  }
  func.func @transform_3(%arg0: i32) -> (i32, i32, i32) {
    %c0_i32 = arith.constant 0 : i32
    %c0_i32_0 = arith.constant 0 : i32
    %c0_i32_1 = arith.constant 0 : i32
    return %arg0, %c0_i32, %c0_i32_0 : i32, i32, i32
  }
  func.func @transform_4(%arg0: i32) -> (i32, i32, i32) {
    %c0_i32 = arith.constant 0 : i32
    %c0_i32_0 = arith.constant 0 : i32
    %c0_i32_1 = arith.constant 0 : i32
    %c0_i32_2 = arith.constant 0 : i32
    return %c0_i32, %c0_i32_0, %c0_i32_1 : i32, i32, i32
  }
  func.func @transform_5(%arg0: i32) -> (i32, i32, i32) {
    %c0_i32 = arith.constant 0 : i32
    %c0_i32_0 = arith.constant 0 : i32
    %c0_i32_1 = arith.constant 0 : i32
    %c0_i32_2 = arith.constant 0 : i32
    return %c0_i32, %c0_i32_0, %c0_i32_1 : i32, i32, i32
  }
  func.func @transform_6(%arg0: i32) -> (i32, i32) {
    %c0_i32 = arith.constant 0 : i32
    %c0_i32_0 = arith.constant 0 : i32
    %c0_i32_1 = arith.constant 0 : i32
    return %c0_i32, %c0_i32_0 : i32, i32
  }
  func.func @transform_7(%arg0: i32) -> (i32, i32) {
    %c0_i32 = arith.constant 0 : i32
    %c0_i32_0 = arith.constant 0 : i32
    %c0_i32_1 = arith.constant 0 : i32
    return %c0_i32, %c0_i32_0 : i32, i32
  }
  func.func @transform_8(%arg0: i32) -> (i32, i32, i32) {
    %c0_i32 = arith.constant 0 : i32
    %c0_i32_0 = arith.constant 0 : i32
    %c0_i32_1 = arith.constant 0 : i32
    return %arg0, %c0_i32, %c0_i32_0 : i32, i32, i32
  }
}

module attributes {stable_mosaic.version = 11 : i64} {
  func.func @_mha_kernel(%arg0: i32, %arg1: memref<1x8x32xbf16, #tpu.memory_space<vmem>>, %arg2: memref<1x8x32xbf16, #tpu.memory_space<vmem>>, %arg3: memref<1x8x32xbf16, #tpu.memory_space<vmem>>, %arg4: memref<1x8x8xf32, #tpu.memory_space<vmem>>, %arg5: memref<3x32x32xbf16, #tpu.memory_space<vmem>>, %arg6: memref<3x1x32xf32, #tpu.memory_space<vmem>>, %arg7: memref<32x32xbf16, #tpu.memory_space<vmem>>, %arg8: memref<1x32xf32, #tpu.memory_space<vmem>>, %arg9: memref<1x8x32xf32, #tpu.memory_space<vmem>>, %arg10: memref<1x8x32xbf16, #tpu.memory_space<vmem>>) attributes {dimension_semantics = [#tpu.dimension_semantics<parallel>], iteration_bounds = array<i64: 2>, scalar_prefetch = 0 : i64, scratch_operands = 1 : i64, tpu.core_type = #tpu.core_type<tc>, window_params = [{transform_indices = @transform_0, window_bounds = array<i64: 1, 8, 32>}, {transform_indices = @transform_1, window_bounds = array<i64: 1, 8, 32>}, {transform_indices = @transform_2, window_bounds = array<i64: 1, 8, 32>}, {transform_indices = @transform_3, window_bounds = array<i64: 1, 8, 8>}, {pipeline_mode = #tpu.pipeline_mode<synchronous>, transform_indices = @transform_4, window_bounds = array<i64: 3, 32, 32>}, {pipeline_mode = #tpu.pipeline_mode<synchronous>, transform_indices = @transform_5, window_bounds = array<i64: 3, 1, 32>}, {pipeline_mode = #tpu.pipeline_mode<synchronous>, transform_indices = @transform_6, window_bounds = array<i64: 32, 32>}, {pipeline_mode = #tpu.pipeline_mode<synchronous>, transform_indices = @transform_7, window_bounds = array<i64: 1, 32>}, {transform_indices = @transform_8, window_bounds = array<i64: 1, 8, 32>}]} {
    %c0 = arith.constant 0 : index
    %c0_0 = arith.constant 0 : index
    %c0_1 = arith.constant 0 : index
    %0 = vector.load %arg1[%c0, %c0_0, %c0_1] : memref<1x8x32xbf16, #tpu.memory_space<vmem>>, vector<1x8x32xbf16>
    %1 = vector.shape_cast %0 : vector<1x8x32xbf16> to vector<8x32xbf16>
    %c0_2 = arith.constant 0 : index
    %c0_3 = arith.constant 0 : index
    %c0_4 = arith.constant 0 : index
    %2 = vector.load %arg2[%c0_2, %c0_3, %c0_4] : memref<1x8x32xbf16, #tpu.memory_space<vmem>>, vector<1x8x32xbf16>
    %3 = vector.shape_cast %2 : vector<1x8x32xbf16> to vector<8x32xbf16>
    %c0_5 = arith.constant 0 : index
    %c0_6 = arith.constant 0 : index
    %c0_7 = arith.constant 0 : index
    %4 = vector.load %arg3[%c0_5, %c0_6, %c0_7] : memref<1x8x32xbf16, #tpu.memory_space<vmem>>, vector<1x8x32xbf16>
    %5 = vector.shape_cast %4 : vector<1x8x32xbf16> to vector<8x32xbf16>
    %c0_8 = arith.constant 0 : index
    %c0_9 = arith.constant 0 : index
    %c0_10 = arith.constant 0 : index
    %6 = vector.load %arg5[%c0_8, %c0_9, %c0_10] : memref<3x32x32xbf16, #tpu.memory_space<vmem>>, vector<1x32x32xbf16>
    %7 = vector.shape_cast %6 : vector<1x32x32xbf16> to vector<32x32xbf16>
    %cst = arith.constant dense<0.000000e+00> : vector<8x32xf32>
    %8 = tpu.matmul %1, %7, %cst {dimension_numbers = #tpu.dot_dimension_numbers<[1], [0], [0], [1], [0, 0, 1, 1], [], []>} : vector<8x32xbf16>, vector<32x32xbf16>, vector<8x32xf32> -> vector<8x32xf32>
    %c0_11 = arith.constant 0 : index
    %c0_12 = arith.constant 0 : index
    %c0_13 = arith.constant 0 : index
    %9 = vector.load %arg6[%c0_11, %c0_12, %c0_13] : memref<3x1x32xf32, #tpu.memory_space<vmem>>, vector<1x1x32xf32>
    %10 = vector.shape_cast %9 : vector<1x1x32xf32> to vector<1x32xf32>
    %11 = vector.broadcast %10 : vector<1x32xf32> to vector<8x32xf32>
    %12 = arith.addf %8, %11 : vector<8x32xf32>
    %13 = arith.truncf %12 : vector<8x32xf32> to vector<8x32xbf16>
    %14 = vector.shape_cast %13 : vector<8x32xbf16> to vector<1x8x32xbf16>
    %c1 = arith.constant 1 : index
    %c0_14 = arith.constant 0 : index
    %c0_15 = arith.constant 0 : index
    %15 = vector.load %arg5[%c1, %c0_14, %c0_15] : memref<3x32x32xbf16, #tpu.memory_space<vmem>>, vector<1x32x32xbf16>
    %16 = vector.shape_cast %15 : vector<1x32x32xbf16> to vector<32x32xbf16>
    %cst_16 = arith.constant dense<0.000000e+00> : vector<8x32xf32>
    %17 = tpu.matmul %3, %16, %cst_16 {dimension_numbers = #tpu.dot_dimension_numbers<[1], [0], [0], [1], [0, 0, 1, 1], [], []>} : vector<8x32xbf16>, vector<32x32xbf16>, vector<8x32xf32> -> vector<8x32xf32>
    %c1_17 = arith.constant 1 : index
    %c0_18 = arith.constant 0 : index
    %c0_19 = arith.constant 0 : index
    %18 = vector.load %arg6[%c1_17, %c0_18, %c0_19] : memref<3x1x32xf32, #tpu.memory_space<vmem>>, vector<1x1x32xf32>
    %19 = vector.shape_cast %18 : vector<1x1x32xf32> to vector<1x32xf32>
    %20 = vector.broadcast %19 : vector<1x32xf32> to vector<8x32xf32>
    %21 = arith.addf %17, %20 : vector<8x32xf32>
    %22 = arith.truncf %21 : vector<8x32xf32> to vector<8x32xbf16>
    %23 = vector.shape_cast %22 : vector<8x32xbf16> to vector<1x8x32xbf16>
    %c2 = arith.constant 2 : index
    %c0_20 = arith.constant 0 : index
    %c0_21 = arith.constant 0 : index
    %24 = vector.load %arg5[%c2, %c0_20, %c0_21] : memref<3x32x32xbf16, #tpu.memory_space<vmem>>, vector<1x32x32xbf16>
    %25 = vector.shape_cast %24 : vector<1x32x32xbf16> to vector<32x32xbf16>
    %cst_22 = arith.constant dense<0.000000e+00> : vector<8x32xf32>
    %26 = tpu.matmul %5, %25, %cst_22 {dimension_numbers = #tpu.dot_dimension_numbers<[1], [0], [0], [1], [0, 0, 1, 1], [], []>} : vector<8x32xbf16>, vector<32x32xbf16>, vector<8x32xf32> -> vector<8x32xf32>
    %c2_23 = arith.constant 2 : index
    %c0_24 = arith.constant 0 : index
    %c0_25 = arith.constant 0 : index
    %27 = vector.load %arg6[%c2_23, %c0_24, %c0_25] : memref<3x1x32xf32, #tpu.memory_space<vmem>>, vector<1x1x32xf32>
    %28 = vector.shape_cast %27 : vector<1x1x32xf32> to vector<1x32xf32>
    %29 = vector.broadcast %28 : vector<1x32xf32> to vector<8x32xf32>
    %30 = arith.addf %26, %29 : vector<8x32xf32>
    %31 = arith.truncf %30 : vector<8x32xf32> to vector<8x32xbf16>
    %32 = vector.shape_cast %31 : vector<8x32xbf16> to vector<1x8x32xbf16>
    %c0_26 = arith.constant 0 : index
    %c0_27 = arith.constant 0 : index
    %c0_28 = arith.constant 0 : index
    %33 = vector.load %arg4[%c0_26, %c0_27, %c0_28] : memref<1x8x8xf32, #tpu.memory_space<vmem>>, vector<1x8x8xf32>
    %cst_29 = arith.constant 0.000000e+00 : f32
    %34 = vector.broadcast %cst_29 : f32 to vector<1x8x8xf32>
    %35 = arith.cmpf oeq, %33, %34 : vector<1x8x8xf32>
    %36 = vector.extract_strided_slice %14 {offsets = [0, 0, 0], sizes = [1, 8, 8], strides = [1, 1, 1]} : vector<1x8x32xbf16> to vector<1x8x8xbf16>
    %37 = vector.extract_strided_slice %23 {offsets = [0, 0, 0], sizes = [1, 8, 8], strides = [1, 1, 1]} : vector<1x8x32xbf16> to vector<1x8x8xbf16>
    %38 = vector.extract_strided_slice %32 {offsets = [0, 0, 0], sizes = [1, 8, 8], strides = [1, 1, 1]} : vector<1x8x32xbf16> to vector<1x8x8xbf16>
    "tpu.trace_start"() <{level = 10 : i32, message = "bqd,bkd->bqk"}> : () -> ()
    %cst_30 = arith.constant dense<0.000000e+00> : vector<1x8x8xf32>
    %39 = tpu.matmul %36, %37, %cst_30 {dimension_numbers = #tpu.dot_dimension_numbers<[2], [2], [1], [1], [0, 0, 0, 1, 1, 1], [0], [0]>} : vector<1x8x8xbf16>, vector<1x8x8xbf16>, vector<1x8x8xf32> -> vector<1x8x8xf32>
    %cst_31 = arith.constant -1.000000e+09 : f32
    "tpu.trace_stop"() : () -> ()
    %40 = vector.broadcast %cst_31 : f32 to vector<1x8x8xf32>
    %41 = arith.select %35, %40, %39 : vector<1x8x8xi1>, vector<1x8x8xf32>
    %cst_32 = arith.constant dense<0xFF800000> : vector<1x8xf32>
    %42 = vector.multi_reduction <maximumf>, %41, %cst_32 [2] : vector<1x8x8xf32> to vector<1x8xf32>
    %43 = vector.shape_cast %42 : vector<1x8xf32> to vector<1x8x1xf32>
    %44 = vector.broadcast %43 : vector<1x8x1xf32> to vector<1x8x8xf32>
    %45 = arith.subf %41, %44 : vector<1x8x8xf32>
    %46 = math.exp %45 : vector<1x8x8xf32>
    %cst_33 = arith.constant dense<0.000000e+00> : vector<1x8xf32>
    %47 = vector.multi_reduction <add>, %46, %cst_33 [2] : vector<1x8x8xf32> to vector<1x8xf32>
    %48 = vector.shape_cast %47 : vector<1x8xf32> to vector<1x8x1xf32>
    %49 = tpu.reciprocal %48 {approx = true} : vector<1x8x1xf32> -> vector<1x8x1xf32>
    %50 = vector.broadcast %49 : vector<1x8x1xf32> to vector<1x8x8xf32>
    %51 = arith.mulf %46, %50 : vector<1x8x8xf32>
    %52 = arith.truncf %51 : vector<1x8x8xf32> to vector<1x8x8xbf16>
    "tpu.trace_start"() <{level = 10 : i32, message = "bqk,bkd->bqd"}> : () -> ()
    %cst_34 = arith.constant dense<0.000000e+00> : vector<1x8x8xf32>
    %53 = tpu.matmul %52, %38, %cst_34 {dimension_numbers = #tpu.dot_dimension_numbers<[2], [1], [1], [2], [0, 0, 0, 1, 1, 2], [0], [0]>} : vector<1x8x8xbf16>, vector<1x8x8xbf16>, vector<1x8x8xf32> -> vector<1x8x8xf32>
    "tpu.trace_stop"() : () -> ()
    %54 = arith.truncf %53 : vector<1x8x8xf32> to vector<1x8x8xbf16>
    %c0_35 = arith.constant 0 : index
    %c0_36 = arith.constant 0 : index
    %c0_37 = arith.constant 0 : index
    %55 = vector.load %arg10[%c0_35, %c0_36, %c0_37] : memref<1x8x32xbf16, #tpu.memory_space<vmem>>, vector<1x8x8xbf16>
    tpu.vector_store %arg10[%c0_35, %c0_36, %c0_37], %54 {strides = array<i32>} : memref<1x8x32xbf16, #tpu.memory_space<vmem>>, vector<1x8x8xbf16>,
    %56 = vector.extract_strided_slice %14 {offsets = [0, 0, 8], sizes = [1, 8, 8], strides = [1, 1, 1]} : vector<1x8x32xbf16> to vector<1x8x8xbf16>
    %57 = vector.extract_strided_slice %23 {offsets = [0, 0, 8], sizes = [1, 8, 8], strides = [1, 1, 1]} : vector<1x8x32xbf16> to vector<1x8x8xbf16>
    %58 = vector.extract_strided_slice %32 {offsets = [0, 0, 8], sizes = [1, 8, 8], strides = [1, 1, 1]} : vector<1x8x32xbf16> to vector<1x8x8xbf16>
    "tpu.trace_start"() <{level = 10 : i32, message = "bqd,bkd->bqk"}> : () -> ()
    %cst_38 = arith.constant dense<0.000000e+00> : vector<1x8x8xf32>
    %59 = tpu.matmul %56, %57, %cst_38 {dimension_numbers = #tpu.dot_dimension_numbers<[2], [2], [1], [1], [0, 0, 0, 1, 1, 1], [0], [0]>} : vector<1x8x8xbf16>, vector<1x8x8xbf16>, vector<1x8x8xf32> -> vector<1x8x8xf32>
    %cst_39 = arith.constant -1.000000e+09 : f32
    "tpu.trace_stop"() : () -> ()
    %60 = vector.broadcast %cst_39 : f32 to vector<1x8x8xf32>
    %61 = arith.select %35, %60, %59 : vector<1x8x8xi1>, vector<1x8x8xf32>
    %cst_40 = arith.constant dense<0xFF800000> : vector<1x8xf32>
    %62 = vector.multi_reduction <maximumf>, %61, %cst_40 [2] : vector<1x8x8xf32> to vector<1x8xf32>
    %63 = vector.shape_cast %62 : vector<1x8xf32> to vector<1x8x1xf32>
    %64 = vector.broadcast %63 : vector<1x8x1xf32> to vector<1x8x8xf32>
    %65 = arith.subf %61, %64 : vector<1x8x8xf32>
    %66 = math.exp %65 : vector<1x8x8xf32>
    %cst_41 = arith.constant dense<0.000000e+00> : vector<1x8xf32>
    %67 = vector.multi_reduction <add>, %66, %cst_41 [2] : vector<1x8x8xf32> to vector<1x8xf32>
    %68 = vector.shape_cast %67 : vector<1x8xf32> to vector<1x8x1xf32>
    %69 = tpu.reciprocal %68 {approx = true} : vector<1x8x1xf32> -> vector<1x8x1xf32>
    %70 = vector.broadcast %69 : vector<1x8x1xf32> to vector<1x8x8xf32>
    %71 = arith.mulf %66, %70 : vector<1x8x8xf32>
    %72 = arith.truncf %71 : vector<1x8x8xf32> to vector<1x8x8xbf16>
    "tpu.trace_start"() <{level = 10 : i32, message = "bqk,bkd->bqd"}> : () -> ()
    %cst_42 = arith.constant dense<0.000000e+00> : vector<1x8x8xf32>
    %73 = tpu.matmul %72, %58, %cst_42 {dimension_numbers = #tpu.dot_dimension_numbers<[2], [1], [1], [2], [0, 0, 0, 1, 1, 2], [0], [0]>} : vector<1x8x8xbf16>, vector<1x8x8xbf16>, vector<1x8x8xf32> -> vector<1x8x8xf32>
    "tpu.trace_stop"() : () -> ()
    %74 = arith.truncf %73 : vector<1x8x8xf32> to vector<1x8x8xbf16>
    %c0_43 = arith.constant 0 : index
    %c0_44 = arith.constant 0 : index
    %c8 = arith.constant 8 : index
    %75 = vector.load %arg10[%c0_43, %c0_44, %c8] : memref<1x8x32xbf16, #tpu.memory_space<vmem>>, vector<1x8x8xbf16>
    tpu.vector_store %arg10[%c0_43, %c0_44, %c8], %74 {strides = array<i32>} : memref<1x8x32xbf16, #tpu.memory_space<vmem>>, vector<1x8x8xbf16>,
    %76 = vector.extract_strided_slice %14 {offsets = [0, 0, 16], sizes = [1, 8, 8], strides = [1, 1, 1]} : vector<1x8x32xbf16> to vector<1x8x8xbf16>
    %77 = vector.extract_strided_slice %23 {offsets = [0, 0, 16], sizes = [1, 8, 8], strides = [1, 1, 1]} : vector<1x8x32xbf16> to vector<1x8x8xbf16>
    %78 = vector.extract_strided_slice %32 {offsets = [0, 0, 16], sizes = [1, 8, 8], strides = [1, 1, 1]} : vector<1x8x32xbf16> to vector<1x8x8xbf16>
    "tpu.trace_start"() <{level = 10 : i32, message = "bqd,bkd->bqk"}> : () -> ()
    %cst_45 = arith.constant dense<0.000000e+00> : vector<1x8x8xf32>
    %79 = tpu.matmul %76, %77, %cst_45 {dimension_numbers = #tpu.dot_dimension_numbers<[2], [2], [1], [1], [0, 0, 0, 1, 1, 1], [0], [0]>} : vector<1x8x8xbf16>, vector<1x8x8xbf16>, vector<1x8x8xf32> -> vector<1x8x8xf32>
    %cst_46 = arith.constant -1.000000e+09 : f32
    "tpu.trace_stop"() : () -> ()
    %80 = vector.broadcast %cst_46 : f32 to vector<1x8x8xf32>
    %81 = arith.select %35, %80, %79 : vector<1x8x8xi1>, vector<1x8x8xf32>
    %cst_47 = arith.constant dense<0xFF800000> : vector<1x8xf32>
    %82 = vector.multi_reduction <maximumf>, %81, %cst_47 [2] : vector<1x8x8xf32> to vector<1x8xf32>
    %83 = vector.shape_cast %82 : vector<1x8xf32> to vector<1x8x1xf32>
    %84 = vector.broadcast %83 : vector<1x8x1xf32> to vector<1x8x8xf32>
    %85 = arith.subf %81, %84 : vector<1x8x8xf32>
    %86 = math.exp %85 : vector<1x8x8xf32>
    %cst_48 = arith.constant dense<0.000000e+00> : vector<1x8xf32>
    %87 = vector.multi_reduction <add>, %86, %cst_48 [2] : vector<1x8x8xf32> to vector<1x8xf32>
    %88 = vector.shape_cast %87 : vector<1x8xf32> to vector<1x8x1xf32>
    %89 = tpu.reciprocal %88 {approx = true} : vector<1x8x1xf32> -> vector<1x8x1xf32>
    %90 = vector.broadcast %89 : vector<1x8x1xf32> to vector<1x8x8xf32>
    %91 = arith.mulf %86, %90 : vector<1x8x8xf32>
    %92 = arith.truncf %91 : vector<1x8x8xf32> to vector<1x8x8xbf16>
    "tpu.trace_start"() <{level = 10 : i32, message = "bqk,bkd->bqd"}> : () -> ()
    %cst_49 = arith.constant dense<0.000000e+00> : vector<1x8x8xf32>
    %93 = tpu.matmul %92, %78, %cst_49 {dimension_numbers = #tpu.dot_dimension_numbers<[2], [1], [1], [2], [0, 0, 0, 1, 1, 2], [0], [0]>} : vector<1x8x8xbf16>, vector<1x8x8xbf16>, vector<1x8x8xf32> -> vector<1x8x8xf32>
    "tpu.trace_stop"() : () -> ()
    %94 = arith.truncf %93 : vector<1x8x8xf32> to vector<1x8x8xbf16>
    %c0_50 = arith.constant 0 : index
    %c0_51 = arith.constant 0 : index
    %c16 = arith.constant 16 : index
    %95 = vector.load %arg10[%c0_50, %c0_51, %c16] : memref<1x8x32xbf16, #tpu.memory_space<vmem>>, vector<1x8x8xbf16>
    tpu.vector_store %arg10[%c0_50, %c0_51, %c16], %94 {strides = array<i32>} : memref<1x8x32xbf16, #tpu.memory_space<vmem>>, vector<1x8x8xbf16>,
    %96 = vector.extract_strided_slice %14 {offsets = [0, 0, 24], sizes = [1, 8, 8], strides = [1, 1, 1]} : vector<1x8x32xbf16> to vector<1x8x8xbf16>
    %97 = vector.extract_strided_slice %23 {offsets = [0, 0, 24], sizes = [1, 8, 8], strides = [1, 1, 1]} : vector<1x8x32xbf16> to vector<1x8x8xbf16>
    %98 = vector.extract_strided_slice %32 {offsets = [0, 0, 24], sizes = [1, 8, 8], strides = [1, 1, 1]} : vector<1x8x32xbf16> to vector<1x8x8xbf16>
    "tpu.trace_start"() <{level = 10 : i32, message = "bqd,bkd->bqk"}> : () -> ()
    %cst_52 = arith.constant dense<0.000000e+00> : vector<1x8x8xf32>
    %99 = tpu.matmul %96, %97, %cst_52 {dimension_numbers = #tpu.dot_dimension_numbers<[2], [2], [1], [1], [0, 0, 0, 1, 1, 1], [0], [0]>} : vector<1x8x8xbf16>, vector<1x8x8xbf16>, vector<1x8x8xf32> -> vector<1x8x8xf32>
    %cst_53 = arith.constant -1.000000e+09 : f32
    "tpu.trace_stop"() : () -> ()
    %100 = vector.broadcast %cst_53 : f32 to vector<1x8x8xf32>
    %101 = arith.select %35, %100, %99 : vector<1x8x8xi1>, vector<1x8x8xf32>
    %cst_54 = arith.constant dense<0xFF800000> : vector<1x8xf32>
    %102 = vector.multi_reduction <maximumf>, %101, %cst_54 [2] : vector<1x8x8xf32> to vector<1x8xf32>
    %103 = vector.shape_cast %102 : vector<1x8xf32> to vector<1x8x1xf32>
    %104 = vector.broadcast %103 : vector<1x8x1xf32> to vector<1x8x8xf32>
    %105 = arith.subf %101, %104 : vector<1x8x8xf32>
    %106 = math.exp %105 : vector<1x8x8xf32>
    %cst_55 = arith.constant dense<0.000000e+00> : vector<1x8xf32>
    %107 = vector.multi_reduction <add>, %106, %cst_55 [2] : vector<1x8x8xf32> to vector<1x8xf32>
    %108 = vector.shape_cast %107 : vector<1x8xf32> to vector<1x8x1xf32>
    %109 = tpu.reciprocal %108 {approx = true} : vector<1x8x1xf32> -> vector<1x8x1xf32>
    %110 = vector.broadcast %109 : vector<1x8x1xf32> to vector<1x8x8xf32>
    %111 = arith.mulf %106, %110 : vector<1x8x8xf32>
    %112 = arith.truncf %111 : vector<1x8x8xf32> to vector<1x8x8xbf16>
    "tpu.trace_start"() <{level = 10 : i32, message = "bqk,bkd->bqd"}> : () -> ()
    %cst_56 = arith.constant dense<0.000000e+00> : vector<1x8x8xf32>
    %113 = tpu.matmul %112, %98, %cst_56 {dimension_numbers = #tpu.dot_dimension_numbers<[2], [1], [1], [2], [0, 0, 0, 1, 1, 2], [0], [0]>} : vector<1x8x8xbf16>, vector<1x8x8xbf16>, vector<1x8x8xf32> -> vector<1x8x8xf32>
    "tpu.trace_stop"() : () -> ()
    %114 = arith.truncf %113 : vector<1x8x8xf32> to vector<1x8x8xbf16>
    %c0_57 = arith.constant 0 : index
    %c0_58 = arith.constant 0 : index
    %c24 = arith.constant 24 : index
    %115 = vector.load %arg10[%c0_57, %c0_58, %c24] : memref<1x8x32xbf16, #tpu.memory_space<vmem>>, vector<1x8x8xbf16>
    tpu.vector_store %arg10[%c0_57, %c0_58, %c24], %114 {strides = array<i32>} : memref<1x8x32xbf16, #tpu.memory_space<vmem>>, vector<1x8x8xbf16>,
    %c0_59 = arith.constant 0 : index
    %c0_60 = arith.constant 0 : index
    %c0_61 = arith.constant 0 : index
    %116 = vector.load %arg10[%c0_59, %c0_60, %c0_61] : memref<1x8x32xbf16, #tpu.memory_space<vmem>>, vector<1x8x32xbf16>
    %117 = vector.shape_cast %116 : vector<1x8x32xbf16> to vector<8x32xbf16>
    %c0_62 = arith.constant 0 : index
    %c0_63 = arith.constant 0 : index
    %118 = vector.load %arg7[%c0_62, %c0_63] : memref<32x32xbf16, #tpu.memory_space<vmem>>, vector<32x32xbf16>
    %cst_64 = arith.constant dense<0.000000e+00> : vector<8x32xf32>
    %119 = tpu.matmul %117, %118, %cst_64 {dimension_numbers = #tpu.dot_dimension_numbers<[1], [0], [0], [1], [0, 0, 1, 1], [], []>} : vector<8x32xbf16>, vector<32x32xbf16>, vector<8x32xf32> -> vector<8x32xf32>
    %c0_65 = arith.constant 0 : index
    %c0_66 = arith.constant 0 : index
    %120 = vector.load %arg8[%c0_65, %c0_66] : memref<1x32xf32, #tpu.memory_space<vmem>>, vector<1x32xf32>
    %121 = vector.broadcast %120 : vector<1x32xf32> to vector<8x32xf32>
    %122 = arith.addf %119, %121 : vector<8x32xf32>
    %123 = vector.shape_cast %122 : vector<8x32xf32> to vector<1x8x32xf32>
    %c0_67 = arith.constant 0 : index
    %c0_68 = arith.constant 0 : index
    %c0_69 = arith.constant 0 : index
    %124 = vector.load %arg9[%c0_67, %c0_68, %c0_69] : memref<1x8x32xf32, #tpu.memory_space<vmem>>, vector<1x8x32xf32>
    tpu.vector_store %arg9[%c0_67, %c0_68, %c0_69], %123 {strides = array<i32>} : memref<1x8x32xf32, #tpu.memory_space<vmem>>, vector<1x8x32xf32>,
    return
  }
  func.func @transform_0(%arg0: i32) -> (i32, i32, i32) {
    %c0_i32 = arith.constant 0 : i32
    %c0_i32_0 = arith.constant 0 : i32
    %c0_i32_1 = arith.constant 0 : i32
    return %arg0, %c0_i32, %c0_i32_0 : i32, i32, i32
  }
  func.func @transform_1(%arg0: i32) -> (i32, i32, i32) {
    %c0_i32 = arith.constant 0 : i32
    %c0_i32_0 = arith.constant 0 : i32
    %c0_i32_1 = arith.constant 0 : i32
    return %arg0, %c0_i32, %c0_i32_0 : i32, i32, i32
  }
  func.func @transform_2(%arg0: i32) -> (i32, i32, i32) {
    %c0_i32 = arith.constant 0 : i32
    %c0_i32_0 = arith.constant 0 : i32
    %c0_i32_1 = arith.constant 0 : i32
    return %arg0, %c0_i32, %c0_i32_0 : i32, i32, i32
  }
  func.func @transform_3(%arg0: i32) -> (i32, i32, i32) {
    %c0_i32 = arith.constant 0 : i32
    %c0_i32_0 = arith.constant 0 : i32
    %c0_i32_1 = arith.constant 0 : i32
    return %arg0, %c0_i32, %c0_i32_0 : i32, i32, i32
  }
  func.func @transform_4(%arg0: i32) -> (i32, i32, i32) {
    %c0_i32 = arith.constant 0 : i32
    %c0_i32_0 = arith.constant 0 : i32
    %c0_i32_1 = arith.constant 0 : i32
    %c0_i32_2 = arith.constant 0 : i32
    return %c0_i32, %c0_i32_0, %c0_i32_1 : i32, i32, i32
  }
  func.func @transform_5(%arg0: i32) -> (i32, i32, i32) {
    %c0_i32 = arith.constant 0 : i32
    %c0_i32_0 = arith.constant 0 : i32
    %c0_i32_1 = arith.constant 0 : i32
    %c0_i32_2 = arith.constant 0 : i32
    return %c0_i32, %c0_i32_0, %c0_i32_1 : i32, i32, i32
  }
  func.func @transform_6(%arg0: i32) -> (i32, i32) {
    %c0_i32 = arith.constant 0 : i32
    %c0_i32_0 = arith.constant 0 : i32
    %c0_i32_1 = arith.constant 0 : i32
    return %c0_i32, %c0_i32_0 : i32, i32
  }
  func.func @transform_7(%arg0: i32) -> (i32, i32) {
    %c0_i32 = arith.constant 0 : i32
    %c0_i32_0 = arith.constant 0 : i32
    %c0_i32_1 = arith.constant 0 : i32
    return %c0_i32, %c0_i32_0 : i32, i32
  }
  func.func @transform_8(%arg0: i32) -> (i32, i32, i32) {
    %c0_i32 = arith.constant 0 : i32
    %c0_i32_0 = arith.constant 0 : i32
    %c0_i32_1 = arith.constant 0 : i32
    return %arg0, %c0_i32, %c0_i32_0 : i32, i32, i32
  }
}

</mosaic_0001>

<llo_original>
// kernel: tpu_custom_call.1
$region0: #{tpu_custom_call.1}
  #allocation0 [shape = 'u32[]', space=smem, size = 0x4, offset = 0x4, fixed_abs, tag = 'smem constant byte address 0x4 - core index']
  #allocation1 [shape = 'u32[72,128]{1,0:T(1,128)}', space=vmem, size = 0x9000, scoped, tag = 'internal scratch']
  #allocation2 [shape = 'bf16[1,8,32]{2,1,0:T(8,128)(2,1)}', space=vmem, size = 0x800, scoped, tag = 'scratch operand']
  %s0 = inlined_call_operand.hbm [shape: bf16[2,8,32], index: 0, kind: input, shape index: {}]
  %s1 = inlined_call_operand.hbm [shape: bf16[2,8,32], index: 1, kind: input, shape index: {}]
  %s2 = inlined_call_operand.hbm [shape: bf16[2,8,32], index: 2, kind: input, shape index: {}]
  %s3 = inlined_call_operand.hbm [shape: f32[2,8,8], index: 3, kind: input, shape index: {}]
  %s4 = inlined_call_operand.hbm [shape: bf16[3,32,32], index: 4, kind: input, shape index: {}]
  %s5 = inlined_call_operand.vmem [shape: f32[3,1,32], index: 5, kind: input, shape index: {}]
  %s6 = inlined_call_operand.hbm [shape: bf16[32,32], index: 6, kind: input, shape index: {}]
  %s7 = inlined_call_operand.vmem [shape: f32[1,32], index: 7, kind: input, shape index: {}]
  %s8 = inlined_call_operand.hbm [shape: f32[2,8,32], index: 8, kind: output, shape index: {}]
  %s9 = sld [smem:[#allocation0]]
  $region89: #{tpu_custom_call.1} parent=0
    _
  %s11 = ssub.s32 1, %s9
  %s12 = scalar_select 0, %s11, %s9
  $region1: #{tpu_custom_call.1} parent=0
    #allocation3 [shape = 'u8[4096]{0}', space=vmem, size = 0x1000, scoped, tag = 'input window, operand 0']
    #allocation4 [shape = 's32[2]{0}', space=sflag, size = 0x8, scoped, tag = 'scoped memory for tpu_custom_call.1']
    #allocation5 [shape = 's32[2]{0}', space=sflag, size = 0x8, scoped, tag = 'scoped memory for tpu_custom_call.1']
    #allocation6 [shape = 'u8[4096]{0}', space=vmem, size = 0x1000, scoped, tag = 'input window, operand 1']
    #allocation7 [shape = 's32[2]{0}', space=sflag, size = 0x8, scoped, tag = 'scoped memory for tpu_custom_call.1']
    #allocation8 [shape = 'u8[4096]{0}', space=vmem, size = 0x1000, scoped, tag = 'input window, operand 2']
    #allocation9 [shape = 'u8[8192]{0}', space=vmem, size = 0x2000, scoped, tag = 'input window, operand 3']
    #allocation10 [shape = 's32[2]{0}', space=sflag, size = 0x8, scoped, tag = 'scoped memory for tpu_custom_call.1']
    #allocation11 [shape = 'u8[24576]{0}', space=vmem, size = 0x6000, scoped, tag = 'input window, operand 4, single buffered']
    #allocation12 [shape = 'u8[8192]{0}', space=vmem, size = 0x2000, scoped, tag = 'input window, operand 6, single buffered']
    #allocation13 [shape = 's32[1]{0}', space=sflag, size = 0x4, scoped, tag = 'scoped memory for tpu_custom_call.1']
    #allocation14 [shape = 'u8[8192]{0}', space=vmem, size = 0x2000, scoped, tag = 'output window, operand 0']
    %13 = vsyncpa [#allocation4], 0
    %s14 = scalar_lea.sflag [#allocation4], 1
    %15 = vsyncpa %s14, 0
    %16 = vsyncpa [#allocation7], 0
    %s17 = scalar_lea.sflag [#allocation7], 1
    %18 = vsyncpa %s17, 0
    %19 = vsyncpa [#allocation10], 0
    %s20 = scalar_lea.sflag [#allocation10], 1
    %21 = vsyncpa %s20, 0
    %22 = vsyncpa [#allocation13], 0
    %23 = vsyncpa [#allocation5], 0
    %s24 = scalar_lea.sflag [#allocation5], 1
    %25 = vsyncpa %s24, 0
    loop: start=0, step=1, limit=4
    $region2: #{tpu_custom_call.1} parent=1 // loop_pre_header
      _
    $region3: #{tpu_custom_call.1} parent=1 // loop_header
      %s27 = sphi 0, %s31
      %p28 = scmp.ge.s32.totalorder %s27, 4
      %s37 = sphi 0, %s39
      %s40 = sphi 0, %s37
      %s41 = sphi 0, %s40
      %s57 = sphi 0, %s41
      %s63 = sphi 0, %s65
      %s66 = sphi 0, %s63
      %s67 = sphi 0, %s66
      %s83 = sphi 0, %s67
      %s89 = sphi 0, %s91
      %s92 = sphi 0, %s89
      %s93 = sphi 0, %s92
      %s109 = sphi 0, %s93
      %s115 = sphi 0, %s117
      %s118 = sphi 0, %s115
      %s119 = sphi 0, %s118
      %s135 = sphi 0, %s119
      %s139 = sphi 0, %s139
      %s141 = sphi 0, %s139
      %s142 = sphi 0, %s141
      %s156 = sphi 0, %s142
      %s160 = sphi 0, %s160
      %s162 = sphi 0, %s160
      %s163 = sphi 0, %s162
      %s177 = sphi 0, %s163
      %s181 = sphi 0, %s181
      %s183 = sphi 0, %s181
      %s184 = sphi 0, %s183
      %s198 = sphi 0, %s184
      %s202 = sphi 0, %s202
      %s204 = sphi 0, %s202
      %s205 = sphi 0, %s204
      %s219 = sphi 0, %s205
      %s225 = sphi 0, %s227
      %s228 = sphi 0, %s225
      %s229 = sphi 0, %s228
      %s245 = sphi 0, %s229
    $region4: #{tpu_custom_call.1} parent=1 // loop_header_branch
      %30 = sbr.rel (%p28) target = $region8
    $region5: #{tpu_custom_call.1} parent=1 // loop_body
      %s32 = ssub.s32 %s27, 1
      %s33 = ssub.s32 %s27, 2
      %s34 = sadd.s32 %s27, 1
      %s35 = ssub.s32 %s27, %s34
      %p36 = scmp.eq.s32.totalorder %s35, 0
      %s38 = sadd.s32 %s37, 1
      %s39 = scalar_select %p36, %s37, %s38
      %p42 = pneg %p36
      %p43 = scmp.eq.s32.totalorder %s27, 1
      %p44 = por %p42, %p43
      %p45 = scmp.ne.s32.totalorder %s37, %s40
      %p46 = scmp.eq.s32.totalorder %s27, 0
      %p47 = por %p45, %p46
      %p48 = scmp.ne.s32.totalorder %s37, %s40
      %p49 = scmp.eq.s32.totalorder %s32, 1
      %p50 = por %p48, %p49
      %p51 = scmp.ne.s32.totalorder %s40, %s41
      %p52 = scmp.eq.s32.totalorder %s32, 0
      %p53 = por %p51, %p52
      %p54 = scmp.ne.s32.totalorder %s40, %s41
      %p55 = scmp.eq.s32.totalorder %s33, 1
      %p56 = por %p54, %p55
      %p58 = scmp.ne.s32.totalorder %s41, %s57
      %p59 = scmp.eq.s32.totalorder %s33, 0
      %p60 = por %p58, %p59
      %s61 = ssub.s32 %s27, %s34
      %p62 = scmp.eq.s32.totalorder %s61, 0
      %s64 = sadd.s32 %s63, 1
      %s65 = scalar_select %p62, %s63, %s64
      %p68 = pneg %p62
      %p69 = scmp.eq.s32.totalorder %s27, 1
      %p70 = por %p68, %p69
      %p71 = scmp.ne.s32.totalorder %s63, %s66
      %p72 = scmp.eq.s32.totalorder %s27, 0
      %p73 = por %p71, %p72
      %p74 = scmp.ne.s32.totalorder %s63, %s66
      %p75 = scmp.eq.s32.totalorder %s32, 1
      %p76 = por %p74, %p75
      %p77 = scmp.ne.s32.totalorder %s66, %s67
      %p78 = scmp.eq.s32.totalorder %s32, 0
      %p79 = por %p77, %p78
      %p80 = scmp.ne.s32.totalorder %s66, %s67
      %p81 = scmp.eq.s32.totalorder %s33, 1
      %p82 = por %p80, %p81
      %p84 = scmp.ne.s32.totalorder %s67, %s83
      %p85 = scmp.eq.s32.totalorder %s33, 0
      %p86 = por %p84, %p85
      %s87 = ssub.s32 %s27, %s34
      %p88 = scmp.eq.s32.totalorder %s87, 0
      %s90 = sadd.s32 %s89, 1
      %s91 = scalar_select %p88, %s89, %s90
      %p94 = pneg %p88
      %p95 = scmp.eq.s32.totalorder %s27, 1
      %p96 = por %p94, %p95
      %p97 = scmp.ne.s32.totalorder %s89, %s92
      %p98 = scmp.eq.s32.totalorder %s27, 0
      %p99 = por %p97, %p98
      %p100 = scmp.ne.s32.totalorder %s89, %s92
      %p101 = scmp.eq.s32.totalorder %s32, 1
      %p102 = por %p100, %p101
      %p103 = scmp.ne.s32.totalorder %s92, %s93
      %p104 = scmp.eq.s32.totalorder %s32, 0
      %p105 = por %p103, %p104
      %p106 = scmp.ne.s32.totalorder %s92, %s93
      %p107 = scmp.eq.s32.totalorder %s33, 1
      %p108 = por %p106, %p107
      %p110 = scmp.ne.s32.totalorder %s93, %s109
      %p111 = scmp.eq.s32.totalorder %s33, 0
      %p112 = por %p110, %p111
      %s113 = ssub.s32 %s27, %s34
      %p114 = scmp.eq.s32.totalorder %s113, 0
      %s116 = sadd.s32 %s115, 1
      %s117 = scalar_select %p114, %s115, %s116
      %p120 = pneg %p114
      %p121 = scmp.eq.s32.totalorder %s27, 1
      %p122 = por %p120, %p121
      %p123 = scmp.ne.s32.totalorder %s115, %s118
      %p124 = scmp.eq.s32.totalorder %s27, 0
      %p125 = por %p123, %p124
      %p126 = scmp.ne.s32.totalorder %s115, %s118
      %p127 = scmp.eq.s32.totalorder %s32, 1
      %p128 = por %p126, %p127
      %p129 = scmp.ne.s32.totalorder %s118, %s119
      %p130 = scmp.eq.s32.totalorder %s32, 0
      %p131 = por %p129, %p130
      %p132 = scmp.ne.s32.totalorder %s118, %s119
      %p133 = scmp.eq.s32.totalorder %s33, 1
      %p134 = por %p132, %p133
      %p136 = scmp.ne.s32.totalorder %s119, %s135
      %p137 = scmp.eq.s32.totalorder %s33, 0
      %p138 = por %p136, %p137
      %s140 = sadd.s32 %s139, 1
      %p143 = scmp.eq.s32.totalorder %s27, 1
      %p144 = scmp.ne.s32.totalorder %s139, %s141
      %p145 = scmp.eq.s32.totalorder %s27, 0
      %p146 = por %p144, %p145
      %p147 = scmp.ne.s32.totalorder %s139, %s141
      %p148 = scmp.eq.s32.totalorder %s32, 1
      %p149 = por %p147, %p148
      %p150 = scmp.ne.s32.totalorder %s141, %s142
      %p151 = scmp.eq.s32.totalorder %s32, 0
      %p152 = por %p150, %p151
      %p153 = scmp.ne.s32.totalorder %s141, %s142
      %p154 = scmp.eq.s32.totalorder %s33, 1
      %p155 = por %p153, %p154
      %p157 = scmp.ne.s32.totalorder %s142, %s156
      %p158 = scmp.eq.s32.totalorder %s33, 0
      %p159 = por %p157, %p158
      %s161 = sadd.s32 %s160, 1
      %p164 = scmp.eq.s32.totalorder %s27, 1
      %p165 = scmp.ne.s32.totalorder %s160, %s162
      %p166 = scmp.eq.s32.totalorder %s27, 0
      %p167 = por %p165, %p166
      %p168 = scmp.ne.s32.totalorder %s160, %s162
      %p169 = scmp.eq.s32.totalorder %s32, 1
      %p170 = por %p168, %p169
      %p171 = scmp.ne.s32.totalorder %s162, %s163
      %p172 = scmp.eq.s32.totalorder %s32, 0
      %p173 = por %p171, %p172
      %p174 = scmp.ne.s32.totalorder %s162, %s163
      %p175 = scmp.eq.s32.totalorder %s33, 1
      %p176 = por %p174, %p175
      %p178 = scmp.ne.s32.totalorder %s163, %s177
      %p179 = scmp.eq.s32.totalorder %s33, 0
      %p180 = por %p178, %p179
      %s182 = sadd.s32 %s181, 1
      %p185 = scmp.eq.s32.totalorder %s27, 1
      %p186 = scmp.ne.s32.totalorder %s181, %s183
      %p187 = scmp.eq.s32.totalorder %s27, 0
      %p188 = por %p186, %p187
      %p189 = scmp.ne.s32.totalorder %s181, %s183
      %p190 = scmp.eq.s32.totalorder %s32, 1
      %p191 = por %p189, %p190
      %p192 = scmp.ne.s32.totalorder %s183, %s184
      %p193 = scmp.eq.s32.totalorder %s32, 0
      %p194 = por %p192, %p193
      %p195 = scmp.ne.s32.totalorder %s183, %s184
      %p196 = scmp.eq.s32.totalorder %s33, 1
      %p197 = por %p195, %p196
      %p199 = scmp.ne.s32.totalorder %s184, %s198
      %p200 = scmp.eq.s32.totalorder %s33, 0
      %p201 = por %p199, %p200
      %s203 = sadd.s32 %s202, 1
      %p206 = scmp.eq.s32.totalorder %s27, 1
      %p207 = scmp.ne.s32.totalorder %s202, %s204
      %p208 = scmp.eq.s32.totalorder %s27, 0
      %p209 = por %p207, %p208
      %p210 = scmp.ne.s32.totalorder %s202, %s204
      %p211 = scmp.eq.s32.totalorder %s32, 1
      %p212 = por %p210, %p211
      %p213 = scmp.ne.s32.totalorder %s204, %s205
      %p214 = scmp.eq.s32.totalorder %s32, 0
      %p215 = por %p213, %p214
      %p216 = scmp.ne.s32.totalorder %s204, %s205
      %p217 = scmp.eq.s32.totalorder %s33, 1
      %p218 = por %p216, %p217
      %p220 = scmp.ne.s32.totalorder %s205, %s219
      %p221 = scmp.eq.s32.totalorder %s33, 0
      %p222 = por %p220, %p221
      %s223 = ssub.s32 %s27, %s34
      %p224 = scmp.eq.s32.totalorder %s223, 0
      %s226 = sadd.s32 %s225, 1
      %s227 = scalar_select %p224, %s225, %s226
      %p230 = pneg %p224
      %p231 = scmp.eq.s32.totalorder %s27, 1
      %p232 = por %p230, %p231
      %p233 = scmp.ne.s32.totalorder %s225, %s228
      %p234 = scmp.eq.s32.totalorder %s27, 0
      %p235 = por %p233, %p234
      %p236 = scmp.ne.s32.totalorder %s225, %s228
      %p237 = scmp.eq.s32.totalorder %s32, 1
      %p238 = por %p236, %p237
      %p239 = scmp.ne.s32.totalorder %s228, %s229
      %p240 = scmp.eq.s32.totalorder %s32, 0
      %p241 = por %p239, %p240
      %p242 = scmp.ne.s32.totalorder %s228, %s229
      %p243 = scmp.eq.s32.totalorder %s33, 1
      %p244 = por %p242, %p243
      %p246 = scmp.ne.s32.totalorder %s229, %s245
      %p247 = scmp.eq.s32.totalorder %s33, 0
      %p248 = por %p246, %p247
      %p249 = scmp.le.s32.totalorder 1, %s27
      %p250 = scmp.lt.s32.totalorder %s27, 3
      %p251 = pnand %p249, %p250
      %p252 = pneg %p251
      // Predicated region
      $region9: #{tpu_custom_call.1} parent=5 // pred_check
        _
      $region10: #{tpu_custom_call.1} parent=5 // pred_check_branch
        %254 = sbr.rel (%p251) target = $region12
      $region11: #{tpu_custom_call.1} parent=5 // pred_region
        %s255 = ssub.s32 %s27, 1
        // Predicated region
        $region13: #{tpu_custom_call.1} parent=11 // pred_check
          %p256 = pneg %p152
        $region14: #{tpu_custom_call.1} parent=11 // pred_check_branch
          %258 = sbr.rel (%p256) target = $region16
        $region15: #{tpu_custom_call.1} parent=11 // pred_region
          %260 = vsyncadd [#allocation10], 0
          %s261 = sshll.u32 %s4, 4
          %s262 = int_to_ptr.hbm [resolvable:$true] %s261
          %s263 = sshll.u32 [#allocation11], 4
          %s264 = int_to_ptr.vmem [resolvable:$true] %s263
          %269 = dma.hbm_to_vmem [thread:$0]  %s262, 768, %s264, [#allocation10], 64, 64, 4
        $region16: #{tpu_custom_call.1} parent=11 // pred_fallthru
          _
        // Predicated region
        $region17: #{tpu_custom_call.1} parent=11 // pred_check
          %p270 = pneg %p173
        $region18: #{tpu_custom_call.1} parent=11 // pred_check_branch
          %272 = sbr.rel (%p270) target = $region20
        $region19: #{tpu_custom_call.1} parent=11 // pred_region
          _
        $region20: #{tpu_custom_call.1} parent=11 // pred_fallthru
          _
        // Predicated region
        $region21: #{tpu_custom_call.1} parent=11 // pred_check
          %p273 = pneg %p194
        $region22: #{tpu_custom_call.1} parent=11 // pred_check_branch
          %275 = sbr.rel (%p273) target = $region24
        $region23: #{tpu_custom_call.1} parent=11 // pred_region
          %277 = vsyncadd [#allocation13], 0
          %s278 = sshll.u32 %s6, 4
          %s279 = int_to_ptr.hbm [resolvable:$true] %s278
          %s280 = sshll.u32 [#allocation12], 4
          %s281 = int_to_ptr.vmem [resolvable:$true] %s280
          %286 = dma.hbm_to_vmem [thread:$0]  %s279, 256, %s281, [#allocation13], 64, 64, 4
        $region24: #{tpu_custom_call.1} parent=11 // pred_fallthru
          _
        // Predicated region
        $region25: #{tpu_custom_call.1} parent=11 // pred_check
          %p287 = pneg %p215
        $region26: #{tpu_custom_call.1} parent=11 // pred_check_branch
          %289 = sbr.rel (%p287) target = $region28
        $region27: #{tpu_custom_call.1} parent=11 // pred_region
          _
        $region28: #{tpu_custom_call.1} parent=11 // pred_fallthru
          _
      $region12: #{tpu_custom_call.1} parent=5 // pred_fallthru
        _
      %p290 = scmp.lt.s32.totalorder %s27, 2
      // Predicated region
      $region29: #{tpu_custom_call.1} parent=5 // pred_check
        %p291 = pneg %p290
      $region30: #{tpu_custom_call.1} parent=5 // pred_check_branch
        %293 = sbr.rel (%p291) target = $region32
      $region31: #{tpu_custom_call.1} parent=5 // pred_region
        // Predicated region
        $region33: #{tpu_custom_call.1} parent=31 // pred_check
          %p294 = pneg %p47
        $region34: #{tpu_custom_call.1} parent=31 // pred_check_branch
          %296 = sbr.rel (%p294) target = $region36
        $region35: #{tpu_custom_call.1} parent=31 // pred_region
          %s297 = sand.u32 %s37, 1
          %s298 = scalar_lea.sflag [#allocation4], %s297
          %s299 = sand.u32 %s37, 1
          %s300 = smul.addr %s299, 4
          %s301 = scalar_lea.vmem [#allocation3], %s300
          %303 = vsyncadd %s298, 0
          %s304 = smul.addr %s27, 4
          %s305 = scalar_lea.hbm %s0, %s304
          %s307 = sshll.u32 %s305, 4
          %s308 = int_to_ptr.hbm [resolvable:$true] %s307
          %s309 = sshll.u32 %s301, 4
          %s310 = int_to_ptr.vmem [resolvable:$true] %s309
          %312 = dma.hbm_to_vmem [thread:$0]  %s308, 64, %s310, %s298
        $region36: #{tpu_custom_call.1} parent=31 // pred_fallthru
          _
        // Predicated region
        $region37: #{tpu_custom_call.1} parent=31 // pred_check
          %p313 = pneg %p73
        $region38: #{tpu_custom_call.1} parent=31 // pred_check_branch
          %315 = sbr.rel (%p313) target = $region40
        $region39: #{tpu_custom_call.1} parent=31 // pred_region
          %s316 = sand.u32 %s27, 1
          %s317 = scalar_lea.sflag [#allocation7], %s316
          %s318 = sand.u32 %s63, 1
          %s319 = smul.addr %s318, 4
          %s320 = scalar_lea.vmem [#allocation6], %s319
          %322 = vsyncadd %s317, 0
          %s323 = smul.addr %s27, 4
          %s324 = scalar_lea.hbm %s1, %s323
          %s326 = sshll.u32 %s324, 4
          %s327 = int_to_ptr.hbm [resolvable:$true] %s326
          %s328 = sshll.u32 %s320, 4
          %s329 = int_to_ptr.vmem [resolvable:$true] %s328
          %331 = dma.hbm_to_vmem [thread:$0]  %s327, 64, %s329, %s317
        $region40: #{tpu_custom_call.1} parent=31 // pred_fallthru
          _
        // Predicated region
        $region41: #{tpu_custom_call.1} parent=31 // pred_check
          %p332 = pneg %p99
        $region42: #{tpu_custom_call.1} parent=31 // pred_check_branch
          %334 = sbr.rel (%p332) target = $region44
        $region43: #{tpu_custom_call.1} parent=31 // pred_region
          %s335 = sand.u32 %s27, 1
          %s336 = scalar_lea.sflag [#allocation7], %s335
          %s337 = sand.u32 %s89, 1
          %s338 = smul.addr %s337, 4
          %s339 = scalar_lea.vmem [#allocation8], %s338
          %341 = vsyncadd %s336, 0
          %s342 = smul.addr %s27, 4
          %s343 = scalar_lea.hbm %s2, %s342
          %s345 = sshll.u32 %s343, 4
          %s346 = int_to_ptr.hbm [resolvable:$true] %s345
          %s347 = sshll.u32 %s339, 4
          %s348 = int_to_ptr.vmem [resolvable:$true] %s347
          %350 = dma.hbm_to_vmem [thread:$0]  %s346, 64, %s348, %s336
        $region44: #{tpu_custom_call.1} parent=31 // pred_fallthru
          _
        // Predicated region
        $region45: #{tpu_custom_call.1} parent=31 // pred_check
          %p351 = pneg %p125
        $region46: #{tpu_custom_call.1} parent=31 // pred_check_branch
          %353 = sbr.rel (%p351) target = $region48
        $region47: #{tpu_custom_call.1} parent=31 // pred_region
          %s354 = sand.u32 %s27, 1
          %s355 = scalar_lea.sflag [#allocation10], %s354
          %s356 = sand.u32 %s115, 1
          %s357 = smul.addr %s356, 8
          %s358 = scalar_lea.vmem [#allocation9], %s357
          %360 = vsyncadd %s355, 0
          %s361 = smul.addr %s27, 8
          %s362 = scalar_lea.hbm %s3, %s361
          %s364 = sshll.u32 %s362, 4
          %s365 = int_to_ptr.hbm [resolvable:$true] %s364
          %s366 = sshll.u32 %s358, 4
          %s367 = int_to_ptr.vmem [resolvable:$true] %s366
          %369 = dma.hbm_to_vmem [thread:$0]  %s365, 128, %s367, %s355
        $region48: #{tpu_custom_call.1} parent=31 // pred_fallthru
          _
      $region32: #{tpu_custom_call.1} parent=5 // pred_fallthru
        _
      %p370 = scmp.le.s32.totalorder 1, %s27
      %p371 = scmp.lt.s32.totalorder %s27, 3
      %p372 = pnand %p370, %p371
      %p373 = pneg %p372
      // Predicated region
      $region49: #{tpu_custom_call.1} parent=5 // pred_check
        _
      $region50: #{tpu_custom_call.1} parent=5 // pred_check_branch
        %375 = sbr.rel (%p372) target = $region52
      $region51: #{tpu_custom_call.1} parent=5 // pred_region
        %s376 = ssub.s32 %s27, 1
        %s377 = sand.u32 %s40, 1
        %s378 = scalar_lea.sflag [#allocation4], %s377
        %s379 = sand.u32 %s40, 1
        %s380 = smul.addr %s379, 4
        %s381 = scalar_lea.vmem [#allocation3], %s380
        // Predicated region
        $region53: #{tpu_custom_call.1} parent=51 // pred_check
          %p382 = pneg %p53
        $region54: #{tpu_custom_call.1} parent=51 // pred_check_branch
          %384 = sbr.rel (%p382) target = $region56
        $region55: #{tpu_custom_call.1} parent=51 // pred_region
          %386 = dma.done %s378, 64
        $region56: #{tpu_custom_call.1} parent=51 // pred_fallthru
          _
        %s387 = sand.u32 %s32, 1
        %s388 = scalar_lea.sflag [#allocation7], %s387
        %s389 = sand.u32 %s66, 1
        %s390 = smul.addr %s389, 4
        %s391 = scalar_lea.vmem [#allocation6], %s390
        // Predicated region
        $region57: #{tpu_custom_call.1} parent=51 // pred_check
          %p392 = pneg %p79
        $region58: #{tpu_custom_call.1} parent=51 // pred_check_branch
          %394 = sbr.rel (%p392) target = $region60
        $region59: #{tpu_custom_call.1} parent=51 // pred_region
          %396 = dma.done %s388, 64
        $region60: #{tpu_custom_call.1} parent=51 // pred_fallthru
          _
        %s397 = sand.u32 %s32, 1
        %s398 = scalar_lea.sflag [#allocation7], %s397
        %s399 = sand.u32 %s92, 1
        %s400 = smul.addr %s399, 4
        %s401 = scalar_lea.vmem [#allocation8], %s400
        // Predicated region
        $region61: #{tpu_custom_call.1} parent=51 // pred_check
          %p402 = pneg %p105
        $region62: #{tpu_custom_call.1} parent=51 // pred_check_branch
          %404 = sbr.rel (%p402) target = $region64
        $region63: #{tpu_custom_call.1} parent=51 // pred_region
          %406 = dma.done %s398, 64
        $region64: #{tpu_custom_call.1} parent=51 // pred_fallthru
          _
        %s407 = sand.u32 %s32, 1
        %s408 = scalar_lea.sflag [#allocation10], %s407
        %s409 = sand.u32 %s118, 1
        %s410 = smul.addr %s409, 8
        %s411 = scalar_lea.vmem [#allocation9], %s410
        // Predicated region
        $region65: #{tpu_custom_call.1} parent=51 // pred_check
          %p412 = pneg %p131
        $region66: #{tpu_custom_call.1} parent=51 // pred_check_branch
          %414 = sbr.rel (%p412) target = $region68
        $region67: #{tpu_custom_call.1} parent=51 // pred_region
          %416 = dma.done %s408, 128
        $region68: #{tpu_custom_call.1} parent=51 // pred_fallthru
          _
        // Predicated region
        $region69: #{tpu_custom_call.1} parent=51 // pred_check
          %p417 = pneg %p152
        $region70: #{tpu_custom_call.1} parent=51 // pred_check_branch
          %419 = sbr.rel (%p417) target = $region72
        $region71: #{tpu_custom_call.1} parent=51 // pred_region
          %421 = dma.done [#allocation10], 768
        $region72: #{tpu_custom_call.1} parent=51 // pred_fallthru
          _
        // Predicated region
        $region73: #{tpu_custom_call.1} parent=51 // pred_check
          %p422 = pneg %p194
        $region74: #{tpu_custom_call.1} parent=51 // pred_check_branch
          %424 = sbr.rel (%p422) target = $region76
        $region75: #{tpu_custom_call.1} parent=51 // pred_region
          %426 = dma.done [#allocation13], 256
        $region76: #{tpu_custom_call.1} parent=51 // pred_fallthru
          _
        %s427 = sand.u32 %s40, 1
        %s428 = scalar_lea.sflag [#allocation4], %s427
        %s429 = sand.u32 %s40, 1
        %s430 = smul.addr %s429, 4
        %s431 = scalar_lea.vmem [#allocation3], %s430
        %p432 = pneg %p53
        %p433 = pneg %p50
        %s434 = sand.u32 %s32, 1
        %s435 = scalar_lea.sflag [#allocation7], %s434
        %s436 = sand.u32 %s66, 1
        %s437 = smul.addr %s436, 4
        %s438 = scalar_lea.vmem [#allocation6], %s437
        %p439 = pneg %p79
        %p440 = pneg %p76
        %s441 = sand.u32 %s32, 1
        %s442 = scalar_lea.sflag [#allocation7], %s441
        %s443 = sand.u32 %s92, 1
        %s444 = smul.addr %s443, 4
        %s445 = scalar_lea.vmem [#allocation8], %s444
        %p446 = pneg %p105
        %p447 = pneg %p102
        %s448 = sand.u32 %s32, 1
        %s449 = scalar_lea.sflag [#allocation10], %s448
        %s450 = sand.u32 %s118, 1
        %s451 = smul.addr %s450, 8
        %s452 = scalar_lea.vmem [#allocation9], %s451
        %p453 = pneg %p131
        %p454 = pneg %p128
        %p455 = pneg %p152
        %p456 = pneg %p149
        %p457 = pneg %p173
        %p458 = pneg %p170
        %p459 = pneg %p194
        %p460 = pneg %p191
        %p461 = pneg %p215
        %p462 = pneg %p212
        %p463 = pneg %p241
        %p464 = pneg %p238
        %s465 = sand.u32 %s228, 1
        %s466 = scalar_lea.sflag [#allocation5], %s465
        %s467 = sand.u32 %s228, 1
        %s468 = smul.addr %s467, 8
        %s469 = scalar_lea.vmem [#allocation14], %s468
        %v471 = vld [vmem:[%s381] sm:$0xf]
        %v472 = vld [vmem:[%s391] sm:$0xf]
        %v473 = vld [vmem:[%s401] sm:$0xf]
        %v474 = vld [vmem:[#allocation11] sm:$0xf]
        %v475 = vld [vmem:[#allocation11 + $0x4] sm:$0xf]
        %v476 = vld [vmem:[#allocation11 + $0x8] sm:$0xf]
        %v477 = vld [vmem:[#allocation11 + $0xc] sm:$0xf]
        %v478 = vld [vmem:[%s5] sm:$0x1]
        %v480 = vperm.slane %v478, 0
        %v486 = vunpack.c.l.b16 %v474
        %v487 = vunpack.c.l.b16 %v475
        %v488 = vunpack.c.l.b16 %v476
        %v489 = vunpack.c.l.b16 %v477
        %v490 = vpack.c.b16 %v487, %v486
        %v491 = vpack.c.b16 %v489, %v488
        %vm494 = vcmask 261120
        %v496 = vsel %vm494, %v471, 0
        %498 = vmatpush.bf16.msra.mxu0 0
        %499 = vmatpush.bf16.msra.mxu0 0
        %500 = vmatpush.bf16.msra.mxu0 0
        %501 = vmatpush.bf16.msra.mxu0 0
        %502 = vmatpush.bf16.msra.mxu0 0
        %503 = vmatpush.bf16.msra.mxu0 0
        %504 = vmatpush.bf16.msra.mxu0 %v491
        %505 = vmatpush.bf16.msra.mxu0 %v490
        %506 = vmatmul.bf16.gmra.mxu0 %v496
        %v507 = vpop.f32.mrf.mxu0
        %v508 = vadd.f32 %v480, %v507
        %v509 = vpop.f32.mrf.mxu0
        %510 = vdwg.mxu0
        %v511 = vpack.c.bf16 %v508, %v508
        %s512 = scalar_lea.vmem [#allocation11], 16
        %v513 = vld [vmem:[%s512] sm:$0xf]
        %v514 = vld [vmem:[%s512 + $0x4] sm:$0xf]
        %v515 = vld [vmem:[%s512 + $0x8] sm:$0xf]
        %v516 = vld [vmem:[%s512 + $0xc] sm:$0xf]
        %s517 = scalar_lea.vmem %s5, 1
        %v518 = vld [vmem:[%s517] sm:$0x1]
        %v520 = vperm.slane %v518, 0
        %v526 = vunpack.c.l.b16 %v513
        %v527 = vunpack.c.l.b16 %v514
        %v528 = vunpack.c.l.b16 %v515
        %v529 = vunpack.c.l.b16 %v516
        %v530 = vpack.c.b16 %v527, %v526
        %v531 = vpack.c.b16 %v529, %v528
        %v535 = vsel %vm494, %v472, 0
        %537 = vmatpush.bf16.msra.mxu0 0
        %538 = vmatpush.bf16.msra.mxu0 0
        %539 = vmatpush.bf16.msra.mxu0 0
        %540 = vmatpush.bf16.msra.mxu0 0
        %541 = vmatpush.bf16.msra.mxu0 0
        %542 = vmatpush.bf16.msra.mxu0 0
        %543 = vmatpush.bf16.msra.mxu0 %v531
        %544 = vmatpush.bf16.msra.mxu0 %v530
        %545 = vmatmul.bf16.gmra.mxu0 %v535
        %v546 = vpop.f32.mrf.mxu0
        %v547 = vadd.f32 %v520, %v546
        %v548 = vpop.f32.mrf.mxu0
        %549 = vdwg.mxu0
        %v550 = vpack.c.bf16 %v547, %v547
        %s551 = scalar_lea.vmem [#allocation11], 32
        %v552 = vld [vmem:[%s551] sm:$0xf]
        %v553 = vld [vmem:[%s551 + $0x4] sm:$0xf]
        %v554 = vld [vmem:[%s551 + $0x8] sm:$0xf]
        %v555 = vld [vmem:[%s551 + $0xc] sm:$0xf]
        %s556 = scalar_lea.vmem %s5, 2
        %v557 = vld [vmem:[%s556] sm:$0x1]
        %v559 = vperm.slane %v557, 0
        %v565 = vunpack.c.l.b16 %v552
        %v566 = vunpack.c.l.b16 %v553
        %v567 = vunpack.c.l.b16 %v554
        %v568 = vunpack.c.l.b16 %v555
        %v569 = vpack.c.b16 %v566, %v565
        %v570 = vpack.c.b16 %v568, %v567
        %v574 = vsel %vm494, %v473, 0
        %576 = vmatpush.bf16.msra.mxu0 0
        %577 = vmatpush.bf16.msra.mxu0 0
        %578 = vmatpush.bf16.msra.mxu0 0
        %579 = vmatpush.bf16.msra.mxu0 0
        %580 = vmatpush.bf16.msra.mxu0 0
        %581 = vmatpush.bf16.msra.mxu0 0
        %582 = vmatpush.bf16.msra.mxu0 %v570
        %583 = vmatpush.bf16.msra.mxu0 %v569
        %584 = vmatmul.bf16.gmra.mxu0 %v574
        %v585 = vpop.f32.mrf.mxu0
        %v586 = vadd.f32 %v559, %v585
        %v587 = vpop.f32.mrf.mxu0
        %588 = vdwg.mxu0
        %v589 = vpack.c.bf16 %v586, %v586
        %v590 = vld [vmem:[%s411] sm:$0xff]
        %vm591 = vcmp.eq.f32.partialorder %v590, 0.0
        %vm592 = vcmask 64512
        %v594 = vsel %vm592, %v511, 0
        %v597 = vsel %vm592, %v550, 0
        %599 = vmatpush.bf16.xpose.msra.mxu0 0
        %600 = vmatpush.bf16.xpose.msra.mxu0 0
        %601 = vmatpush.bf16.xpose.msra.mxu0 0
        %602 = vmatpush.bf16.xpose.msra.mxu0 0
        %603 = vmatpush.bf16.xpose.msra.mxu0 0
        %604 = vmatpush.bf16.xpose.msra.mxu0 0
        %605 = vmatpush.bf16.xpose.msra.mxu0 0
        %606 = vmatpush.bf16.xpose.msra.mxu0 %v597
        %607 = vmatmul.bf16.gmra.mxu0 %v594
        %v608 = vpop.f32.mrf.mxu0
        %v609 = vadd.f32 0.0, %v608
        %v610 = vpop.f32.mrf.mxu0
        %611 = vdwg.mxu0
        %v612 = vsel %vm591, -1e+09, %v609
        %v613 = vsel %vm592, %v612, -inf
        %614 = vmax.xlane.f32.xlu0 %v613
        %v615 = vpop.xlane.xlu0 %614
        %v616 = vsub.f32 %v612, %v615
        %v617 = vmul.f32 %v616, 1.442695
        %v618 = vpow.pop %v617
        %v619 = vsel %vm592, %v618, 0.0
        %620 = vadd.xlane.f32.xlu0 %v619
        %v621 = vpop.xlane.xlu0 %620
        %v622 = vrcp.pop %v621
        %v623 = vmul.f32 %v618, %v622
        %v624 = vpack.c.bf16 %v623, %v623
        %v626 = vsel %vm592, %v624, 0
        %vm628 = vcmask 1043456
        %v630 = vsel %vm628, %v589, 0
        %632 = vmatpush.bf16.msra.mxu0 0
        %633 = vmatpush.bf16.msra.mxu0 0
        %634 = vmatpush.bf16.msra.mxu0 0
        %635 = vmatpush.bf16.msra.mxu0 0
        %636 = vmatpush.bf16.msra.mxu0 0
        %637 = vmatpush.bf16.msra.mxu0 0
        %638 = vmatpush.bf16.msra.mxu0 0
        %639 = vmatpush.bf16.msra.mxu0 %v630
        %640 = vmatmul.bf16.gmra.mxu0 %v626
        %v641 = vpop.f32.mrf.mxu0
        %v642 = vadd.f32 0.0, %v641
        %v643 = vpop.f32.mrf.mxu0
        %644 = vdwg.mxu0
        %v645 = vpack.c.bf16 %v642, %v642
        %vm646 = vcmask 60416
        %647 = vst.msk [vmem:[#allocation2] sm:$0xf] %vm646, %v645
        %v649 = vunpack.c.l.b16 %v511
        %v650 = vpack.c.b16 %v649, %v649
        %651 = vrot.lane.b32.xlu0 %v650, 120
        %v652 = vpop.permute.xlu0 %651
        %v654 = vunpack.c.l.b16 %v550
        %v655 = vpack.c.b16 %v654, %v654
        %656 = vrot.lane.b32.xlu0 %v655, 120
        %v657 = vpop.permute.xlu0 %656
        %v659 = vsel %vm592, %v652, 0
        %v662 = vsel %vm592, %v657, 0
        %664 = vmatpush.bf16.xpose.msra.mxu0 0
        %665 = vmatpush.bf16.xpose.msra.mxu0 0
        %666 = vmatpush.bf16.xpose.msra.mxu0 0
        %667 = vmatpush.bf16.xpose.msra.mxu0 0
        %668 = vmatpush.bf16.xpose.msra.mxu0 0
        %669 = vmatpush.bf16.xpose.msra.mxu0 0
        %670 = vmatpush.bf16.xpose.msra.mxu0 0
        %671 = vmatpush.bf16.xpose.msra.mxu0 %v662
        %672 = vmatmul.bf16.gmra.mxu0 %v659
        %v673 = vpop.f32.mrf.mxu0
        %v674 = vadd.f32 0.0, %v673
        %v675 = vpop.f32.mrf.mxu0
        %676 = vdwg.mxu0
        %v677 = vsel %vm591, -1e+09, %v674
        %v678 = vsel %vm592, %v677, -inf
        %679 = vmax.xlane.f32.xlu0 %v678
        %v680 = vpop.xlane.xlu0 %679
        %v681 = vsub.f32 %v677, %v680
        %v682 = vmul.f32 %v681, 1.442695
        %v683 = vpow.pop %v682
        %v684 = vsel %vm592, %v683, 0.0
        %685 = vadd.xlane.f32.xlu0 %v684
        %v686 = vpop.xlane.xlu0 %685
        %v687 = vrcp.pop %v686
        %v688 = vmul.f32 %v683, %v687
        %v689 = vpack.c.bf16 %v688, %v688
        %v691 = vunpack.c.l.b16 %v589
        %v692 = vpack.c.b16 %v691, %v691
        %693 = vrot.lane.b32.xlu0 %v692, 120
        %v694 = vpop.permute.xlu0 %693
        %v696 = vsel %vm592, %v689, 0
        %v699 = vsel %vm628, %v694, 0
        %701 = vmatpush.bf16.msra.mxu0 0
        %702 = vmatpush.bf16.msra.mxu0 0
        %703 = vmatpush.bf16.msra.mxu0 0
        %704 = vmatpush.bf16.msra.mxu0 0
        %705 = vmatpush.bf16.msra.mxu0 0
        %706 = vmatpush.bf16.msra.mxu0 0
        %707 = vmatpush.bf16.msra.mxu0 0
        %708 = vmatpush.bf16.msra.mxu0 %v699
        %709 = vmatmul.bf16.gmra.mxu0 %v696
        %v710 = vpop.f32.mrf.mxu0
        %v711 = vadd.f32 0.0, %v710
        %v712 = vpop.f32.mrf.mxu0
        %713 = vdwg.mxu0
        %v714 = vpack.c.bf16 %v711, %v711
        %716 = vrot.lane.b32.xlu0 %v714, 8
        %v717 = vpop.permute.xlu0 %716
        %vm719 = vcmask 126016
        %720 = vst.msk [vmem:[#allocation2] sm:$0xf] %vm719, %v717
        %721 = vrot.lane.b32.xlu0 %v650, 112
        %v722 = vpop.permute.xlu0 %721
        %723 = vrot.lane.b32.xlu0 %v655, 112
        %v724 = vpop.permute.xlu0 %723
        %v726 = vsel %vm592, %v722, 0
        %v729 = vsel %vm592, %v724, 0
        %731 = vmatpush.bf16.xpose.msra.mxu0 0
        %732 = vmatpush.bf16.xpose.msra.mxu0 0
        %733 = vmatpush.bf16.xpose.msra.mxu0 0
        %734 = vmatpush.bf16.xpose.msra.mxu0 0
        %735 = vmatpush.bf16.xpose.msra.mxu0 0
        %736 = vmatpush.bf16.xpose.msra.mxu0 0
        %737 = vmatpush.bf16.xpose.msra.mxu0 0
        %738 = vmatpush.bf16.xpose.msra.mxu0 %v729
        %739 = vmatmul.bf16.gmra.mxu0 %v726
        %v740 = vpop.f32.mrf.mxu0
        %v741 = vadd.f32 0.0, %v740
        %v742 = vpop.f32.mrf.mxu0
        %743 = vdwg.mxu0
        %v744 = vsel %vm591, -1e+09, %v741
        %v745 = vsel %vm592, %v744, -inf
        %746 = vmax.xlane.f32.xlu0 %v745
        %v747 = vpop.xlane.xlu0 %746
        %v748 = vsub.f32 %v744, %v747
        %v749 = vmul.f32 %v748, 1.442695
        %v750 = vpow.pop %v749
        %v751 = vsel %vm592, %v750, 0.0
        %752 = vadd.xlane.f32.xlu0 %v751
        %v753 = vpop.xlane.xlu0 %752
        %v754 = vrcp.pop %v753
        %v755 = vmul.f32 %v750, %v754
        %v756 = vpack.c.bf16 %v755, %v755
        %757 = vrot.lane.b32.xlu0 %v692, 112
        %v758 = vpop.permute.xlu0 %757
        %v760 = vsel %vm592, %v756, 0
        %v763 = vsel %vm628, %v758, 0
        %765 = vmatpush.bf16.msra.mxu0 0
        %766 = vmatpush.bf16.msra.mxu0 0
        %767 = vmatpush.bf16.msra.mxu0 0
        %768 = vmatpush.bf16.msra.mxu0 0
        %769 = vmatpush.bf16.msra.mxu0 0
        %770 = vmatpush.bf16.msra.mxu0 0
        %771 = vmatpush.bf16.msra.mxu0 0
        %772 = vmatpush.bf16.msra.mxu0 %v763
        %773 = vmatmul.bf16.gmra.mxu0 %v760
        %v774 = vpop.f32.mrf.mxu0
        %v775 = vadd.f32 0.0, %v774
        %v776 = vpop.f32.mrf.mxu0
        %777 = vdwg.mxu0
        %v778 = vpack.c.bf16 %v775, %v775
        %780 = vrot.lane.b32.xlu0 %v778, 16
        %v781 = vpop.permute.xlu0 %780
        %vm783 = vcmask 191616
        %784 = vst.msk [vmem:[#allocation2] sm:$0xf] %vm783, %v781
        %785 = vrot.lane.b32.xlu0 %v650, 104
        %v786 = vpop.permute.xlu0 %785
        %787 = vrot.lane.b32.xlu0 %v655, 104
        %v788 = vpop.permute.xlu0 %787
        %v790 = vsel %vm592, %v786, 0
        %v793 = vsel %vm592, %v788, 0
        %795 = vmatpush.bf16.xpose.msra.mxu0 0
        %796 = vmatpush.bf16.xpose.msra.mxu0 0
        %797 = vmatpush.bf16.xpose.msra.mxu0 0
        %798 = vmatpush.bf16.xpose.msra.mxu0 0
        %799 = vmatpush.bf16.xpose.msra.mxu0 0
        %800 = vmatpush.bf16.xpose.msra.mxu0 0
        %801 = vmatpush.bf16.xpose.msra.mxu0 0
        %802 = vmatpush.bf16.xpose.msra.mxu0 %v793
        %803 = vmatmul.bf16.gmra.mxu0 %v790
        %v804 = vpop.f32.mrf.mxu0
        %v805 = vadd.f32 0.0, %v804
        %v806 = vpop.f32.mrf.mxu0
        %807 = vdwg.mxu0
        %v808 = vsel %vm591, -1e+09, %v805
        %v809 = vsel %vm592, %v808, -inf
        %810 = vmax.xlane.f32.xlu0 %v809
        %v811 = vpop.xlane.xlu0 %810
        %v812 = vsub.f32 %v808, %v811
        %v813 = vmul.f32 %v812, 1.442695
        %v814 = vpow.pop %v813
        %v815 = vsel %vm592, %v814, 0.0
        %816 = vadd.xlane.f32.xlu0 %v815
        %v817 = vpop.xlane.xlu0 %816
        %v818 = vrcp.pop %v817
        %v819 = vmul.f32 %v814, %v818
        %v820 = vpack.c.bf16 %v819, %v819
        %821 = vrot.lane.b32.xlu0 %v692, 104
        %v822 = vpop.permute.xlu0 %821
        %v824 = vsel %vm592, %v820, 0
        %v827 = vsel %vm628, %v822, 0
        %829 = vmatpush.bf16.msra.mxu0 0
        %830 = vmatpush.bf16.msra.mxu0 0
        %831 = vmatpush.bf16.msra.mxu0 0
        %832 = vmatpush.bf16.msra.mxu0 0
        %833 = vmatpush.bf16.msra.mxu0 0
        %834 = vmatpush.bf16.msra.mxu0 0
        %835 = vmatpush.bf16.msra.mxu0 0
        %836 = vmatpush.bf16.msra.mxu0 %v827
        %837 = vmatmul.bf16.gmra.mxu0 %v824
        %v838 = vpop.f32.mrf.mxu0
        %v839 = vadd.f32 0.0, %v838
        %v840 = vpop.f32.mrf.mxu0
        %841 = vdwg.mxu0
        %v842 = vpack.c.bf16 %v839, %v839
        %844 = vrot.lane.b32.xlu0 %v842, 24
        %v845 = vpop.permute.xlu0 %844
        %vm847 = vcmask 257216
        %848 = vst.msk [vmem:[#allocation2] sm:$0xf] %vm847, %v845
        %v849 = vld [vmem:[#allocation2] sm:$0xf]
        %v850 = vld [vmem:[#allocation12] sm:$0xf]
        %v851 = vld [vmem:[#allocation12 + $0x4] sm:$0xf]
        %v852 = vld [vmem:[#allocation12 + $0x8] sm:$0xf]
        %v853 = vld [vmem:[#allocation12 + $0xc] sm:$0xf]
        %v854 = vld [vmem:[%s7] sm:$0x1]
        %v856 = vperm.slane %v854, 0
        %v862 = vunpack.c.l.b16 %v850
        %v863 = vunpack.c.l.b16 %v851
        %v864 = vunpack.c.l.b16 %v852
        %v865 = vunpack.c.l.b16 %v853
        %v866 = vpack.c.b16 %v863, %v862
        %v867 = vpack.c.b16 %v865, %v864
        %v871 = vsel %vm494, %v849, 0
        %873 = vmatpush.bf16.msra.mxu0 0
        %874 = vmatpush.bf16.msra.mxu0 0
        %875 = vmatpush.bf16.msra.mxu0 0
        %876 = vmatpush.bf16.msra.mxu0 0
        %877 = vmatpush.bf16.msra.mxu0 0
        %878 = vmatpush.bf16.msra.mxu0 0
        %879 = vmatpush.bf16.msra.mxu0 %v867
        %880 = vmatpush.bf16.msra.mxu0 %v866
        %881 = vmatmul.bf16.gmra.mxu0 %v871
        %v882 = vpop.f32.mrf.mxu0
        %v883 = vadd.f32 %v856, %v882
        %v884 = vpop.f32.mrf.mxu0
        %885 = vdwg.mxu0
        %886 = vst.msk [vmem:[%s469] sm:$0xff] %vm494, %v883
        %s887 = sand.u32 %s228, 1
        %s888 = scalar_lea.sflag [#allocation5], %s887
        %s889 = sand.u32 %s228, 1
        %s890 = smul.addr %s889, 8
        %s891 = scalar_lea.vmem [#allocation14], %s890
        // Predicated region
        $region77: #{tpu_custom_call.1} parent=51 // pred_check
          %p892 = pneg %p238
        $region78: #{tpu_custom_call.1} parent=51 // pred_check_branch
          %894 = sbr.rel (%p892) target = $region80
        $region79: #{tpu_custom_call.1} parent=51 // pred_region
          %896 = vsyncadd %s888, 0
          %s897 = smul.addr %s32, 8
          %s898 = scalar_lea.hbm %s8, %s897
          %s900 = sshll.u32 %s891, 4
          %s901 = int_to_ptr.vmem [resolvable:$true] %s900
          %s902 = sshll.u32 %s898, 4
          %s903 = int_to_ptr.hbm [resolvable:$true] %s902
          %905 = dma.vmem_to_hbm [thread:$0]  %s901, 128, %s903, %s888
        $region80: #{tpu_custom_call.1} parent=51 // pred_fallthru
          _
      $region52: #{tpu_custom_call.1} parent=5 // pred_fallthru
        _
      %p906 = scmp.le.s32.totalorder 2, %s27
      // Predicated region
      $region81: #{tpu_custom_call.1} parent=5 // pred_check
        %p907 = pneg %p906
      $region82: #{tpu_custom_call.1} parent=5 // pred_check_branch
        %909 = sbr.rel (%p907) target = $region84
      $region83: #{tpu_custom_call.1} parent=5 // pred_region
        %s910 = ssub.s32 %s27, 2
        // Predicated region
        $region85: #{tpu_custom_call.1} parent=83 // pred_check
          %p911 = pneg %p244
        $region86: #{tpu_custom_call.1} parent=83 // pred_check_branch
          %913 = sbr.rel (%p911) target = $region88
        $region87: #{tpu_custom_call.1} parent=83 // pred_region
          %s914 = sand.u32 %s229, 1
          %s915 = scalar_lea.sflag [#allocation5], %s914
          %s916 = sand.u32 %s229, 1
          %s917 = smul.addr %s916, 8
          %s918 = scalar_lea.vmem [#allocation14], %s917
          %920 = dma.done %s915, 128
        $region88: #{tpu_custom_call.1} parent=83 // pred_fallthru
          _
      $region84: #{tpu_custom_call.1} parent=5 // pred_fallthru
        _
    $region6: #{tpu_custom_call.1} parent=1 // loop_footer
      %s31 = sadd.s32 1, %s27
    $region7: #{tpu_custom_call.1} parent=1 // loop_footer_branch
      %26 = sbr.rel target = $region3
    $region8: #{tpu_custom_call.1} parent=1 // loop_exit
      _
    %921 = vsyncpa [#allocation4], 1
    %s922 = scalar_lea.sflag [#allocation4], 1
    %923 = vsyncpa %s922, 1
    %924 = vsyncpa [#allocation7], 1
    %s925 = scalar_lea.sflag [#allocation7], 1
    %926 = vsyncpa %s925, 1
    %927 = vsyncpa [#allocation10], 1
    %s928 = scalar_lea.sflag [#allocation10], 1
    %929 = vsyncpa %s928, 1
    %930 = vsyncpa [#allocation13], 1
    %931 = vsyncpa [#allocation5], 1
    %s932 = scalar_lea.sflag [#allocation5], 1
    %933 = vsyncpa %s932, 1

// kernel: tpu_custom_call.1
$region0: #{tpu_custom_call.1}
  #allocation0 [shape = 'u32[]', space=smem, size = 0x4, offset = 0x4, fixed_abs, tag = 'smem constant byte address 0x4 - core index']
  #allocation1 [shape = 'u32[72,128]{1,0:T(1,128)}', space=vmem, size = 0x9000, scoped, tag = 'internal scratch']
  #allocation2 [shape = 'bf16[1,8,32]{2,1,0:T(8,128)(2,1)}', space=vmem, size = 0x800, scoped, tag = 'scratch operand']
  %s0 = inlined_call_operand.hbm [shape: bf16[2,8,32], index: 0, kind: input, shape index: {}]
  %s1 = inlined_call_operand.hbm [shape: bf16[2,8,32], index: 1, kind: input, shape index: {}]
  %s2 = inlined_call_operand.hbm [shape: bf16[2,8,32], index: 2, kind: input, shape index: {}]
  %s3 = inlined_call_operand.hbm [shape: f32[2,8,8], index: 3, kind: input, shape index: {}]
  %s4 = inlined_call_operand.hbm [shape: bf16[3,32,32], index: 4, kind: input, shape index: {}]
  %s5 = inlined_call_operand.vmem [shape: f32[3,1,32], index: 5, kind: input, shape index: {}]
  %s6 = inlined_call_operand.hbm [shape: bf16[32,32], index: 6, kind: input, shape index: {}]
  %s7 = inlined_call_operand.vmem [shape: f32[1,32], index: 7, kind: input, shape index: {}]
  %s8 = inlined_call_operand.hbm [shape: f32[2,8,32], index: 8, kind: output, shape index: {}]
  %s9 = sld [smem:[#allocation0]]
  $region89: #{tpu_custom_call.1} parent=0
    _
  %s11 = ssub.s32 1, %s9
  %s12 = scalar_select 0, %s11, %s9
  $region1: #{tpu_custom_call.1} parent=0
    #allocation3 [shape = 'u8[4096]{0}', space=vmem, size = 0x1000, scoped, tag = 'input window, operand 0']
    #allocation4 [shape = 's32[2]{0}', space=sflag, size = 0x8, scoped, tag = 'scoped memory for tpu_custom_call.1']
    #allocation5 [shape = 's32[2]{0}', space=sflag, size = 0x8, scoped, tag = 'scoped memory for tpu_custom_call.1']
    #allocation6 [shape = 'u8[4096]{0}', space=vmem, size = 0x1000, scoped, tag = 'input window, operand 1']
    #allocation7 [shape = 's32[2]{0}', space=sflag, size = 0x8, scoped, tag = 'scoped memory for tpu_custom_call.1']
    #allocation8 [shape = 'u8[4096]{0}', space=vmem, size = 0x1000, scoped, tag = 'input window, operand 2']
    #allocation9 [shape = 'u8[8192]{0}', space=vmem, size = 0x2000, scoped, tag = 'input window, operand 3']
    #allocation10 [shape = 's32[2]{0}', space=sflag, size = 0x8, scoped, tag = 'scoped memory for tpu_custom_call.1']
    #allocation11 [shape = 'u8[24576]{0}', space=vmem, size = 0x6000, scoped, tag = 'input window, operand 4, single buffered']
    #allocation12 [shape = 'u8[8192]{0}', space=vmem, size = 0x2000, scoped, tag = 'input window, operand 6, single buffered']
    #allocation13 [shape = 's32[1]{0}', space=sflag, size = 0x4, scoped, tag = 'scoped memory for tpu_custom_call.1']
    #allocation14 [shape = 'u8[8192]{0}', space=vmem, size = 0x2000, scoped, tag = 'output window, operand 0']
    %13 = vsyncpa [#allocation4], 0
    %s14 = scalar_lea.sflag [#allocation4], 1
    %15 = vsyncpa %s14, 0
    %16 = vsyncpa [#allocation7], 0
    %s17 = scalar_lea.sflag [#allocation7], 1
    %18 = vsyncpa %s17, 0
    %19 = vsyncpa [#allocation10], 0
    %s20 = scalar_lea.sflag [#allocation10], 1
    %21 = vsyncpa %s20, 0
    %22 = vsyncpa [#allocation13], 0
    %23 = vsyncpa [#allocation5], 0
    %s24 = scalar_lea.sflag [#allocation5], 1
    %25 = vsyncpa %s24, 0
    loop: start=0, step=1, limit=4
    $region2: #{tpu_custom_call.1} parent=1 // loop_pre_header
      _
    $region3: #{tpu_custom_call.1} parent=1 // loop_header
      %s27 = sphi 0, %s31
      %p28 = scmp.ge.s32.totalorder %s27, 4
      %s37 = sphi 0, %s39
      %s40 = sphi 0, %s37
      %s41 = sphi 0, %s40
      %s57 = sphi 0, %s41
      %s63 = sphi 0, %s65
      %s66 = sphi 0, %s63
      %s67 = sphi 0, %s66
      %s83 = sphi 0, %s67
      %s89 = sphi 0, %s91
      %s92 = sphi 0, %s89
      %s93 = sphi 0, %s92
      %s109 = sphi 0, %s93
      %s115 = sphi 0, %s117
      %s118 = sphi 0, %s115
      %s119 = sphi 0, %s118
      %s135 = sphi 0, %s119
      %s139 = sphi 0, %s139
      %s141 = sphi 0, %s139
      %s142 = sphi 0, %s141
      %s156 = sphi 0, %s142
      %s160 = sphi 0, %s160
      %s162 = sphi 0, %s160
      %s163 = sphi 0, %s162
      %s177 = sphi 0, %s163
      %s181 = sphi 0, %s181
      %s183 = sphi 0, %s181
      %s184 = sphi 0, %s183
      %s198 = sphi 0, %s184
      %s202 = sphi 0, %s202
      %s204 = sphi 0, %s202
      %s205 = sphi 0, %s204
      %s219 = sphi 0, %s205
      %s225 = sphi 0, %s227
      %s228 = sphi 0, %s225
      %s229 = sphi 0, %s228
      %s245 = sphi 0, %s229
    $region4: #{tpu_custom_call.1} parent=1 // loop_header_branch
      %30 = sbr.rel (%p28) target = $region8
    $region5: #{tpu_custom_call.1} parent=1 // loop_body
      %s32 = ssub.s32 %s27, 1
      %s33 = ssub.s32 %s27, 2
      %s34 = sadd.s32 %s27, 1
      %s35 = ssub.s32 %s27, %s34
      %p36 = scmp.eq.s32.totalorder %s35, 0
      %s38 = sadd.s32 %s37, 1
      %s39 = scalar_select %p36, %s37, %s38
      %p42 = pneg %p36
      %p43 = scmp.eq.s32.totalorder %s27, 1
      %p44 = por %p42, %p43
      %p45 = scmp.ne.s32.totalorder %s37, %s40
      %p46 = scmp.eq.s32.totalorder %s27, 0
      %p47 = por %p45, %p46
      %p48 = scmp.ne.s32.totalorder %s37, %s40
      %p49 = scmp.eq.s32.totalorder %s32, 1
      %p50 = por %p48, %p49
      %p51 = scmp.ne.s32.totalorder %s40, %s41
      %p52 = scmp.eq.s32.totalorder %s32, 0
      %p53 = por %p51, %p52
      %p54 = scmp.ne.s32.totalorder %s40, %s41
      %p55 = scmp.eq.s32.totalorder %s33, 1
      %p56 = por %p54, %p55
      %p58 = scmp.ne.s32.totalorder %s41, %s57
      %p59 = scmp.eq.s32.totalorder %s33, 0
      %p60 = por %p58, %p59
      %s61 = ssub.s32 %s27, %s34
      %p62 = scmp.eq.s32.totalorder %s61, 0
      %s64 = sadd.s32 %s63, 1
      %s65 = scalar_select %p62, %s63, %s64
      %p68 = pneg %p62
      %p69 = scmp.eq.s32.totalorder %s27, 1
      %p70 = por %p68, %p69
      %p71 = scmp.ne.s32.totalorder %s63, %s66
      %p72 = scmp.eq.s32.totalorder %s27, 0
      %p73 = por %p71, %p72
      %p74 = scmp.ne.s32.totalorder %s63, %s66
      %p75 = scmp.eq.s32.totalorder %s32, 1
      %p76 = por %p74, %p75
      %p77 = scmp.ne.s32.totalorder %s66, %s67
      %p78 = scmp.eq.s32.totalorder %s32, 0
      %p79 = por %p77, %p78
      %p80 = scmp.ne.s32.totalorder %s66, %s67
      %p81 = scmp.eq.s32.totalorder %s33, 1
      %p82 = por %p80, %p81
      %p84 = scmp.ne.s32.totalorder %s67, %s83
      %p85 = scmp.eq.s32.totalorder %s33, 0
      %p86 = por %p84, %p85
      %s87 = ssub.s32 %s27, %s34
      %p88 = scmp.eq.s32.totalorder %s87, 0
      %s90 = sadd.s32 %s89, 1
      %s91 = scalar_select %p88, %s89, %s90
      %p94 = pneg %p88
      %p95 = scmp.eq.s32.totalorder %s27, 1
      %p96 = por %p94, %p95
      %p97 = scmp.ne.s32.totalorder %s89, %s92
      %p98 = scmp.eq.s32.totalorder %s27, 0
      %p99 = por %p97, %p98
      %p100 = scmp.ne.s32.totalorder %s89, %s92
      %p101 = scmp.eq.s32.totalorder %s32, 1
      %p102 = por %p100, %p101
      %p103 = scmp.ne.s32.totalorder %s92, %s93
      %p104 = scmp.eq.s32.totalorder %s32, 0
      %p105 = por %p103, %p104
      %p106 = scmp.ne.s32.totalorder %s92, %s93
      %p107 = scmp.eq.s32.totalorder %s33, 1
      %p108 = por %p106, %p107
      %p110 = scmp.ne.s32.totalorder %s93, %s109
      %p111 = scmp.eq.s32.totalorder %s33, 0
      %p112 = por %p110, %p111
      %s113 = ssub.s32 %s27, %s34
      %p114 = scmp.eq.s32.totalorder %s113, 0
      %s116 = sadd.s32 %s115, 1
      %s117 = scalar_select %p114, %s115, %s116
      %p120 = pneg %p114
      %p121 = scmp.eq.s32.totalorder %s27, 1
      %p122 = por %p120, %p121
      %p123 = scmp.ne.s32.totalorder %s115, %s118
      %p124 = scmp.eq.s32.totalorder %s27, 0
      %p125 = por %p123, %p124
      %p126 = scmp.ne.s32.totalorder %s115, %s118
      %p127 = scmp.eq.s32.totalorder %s32, 1
      %p128 = por %p126, %p127
      %p129 = scmp.ne.s32.totalorder %s118, %s119
      %p130 = scmp.eq.s32.totalorder %s32, 0
      %p131 = por %p129, %p130
      %p132 = scmp.ne.s32.totalorder %s118, %s119
      %p133 = scmp.eq.s32.totalorder %s33, 1
      %p134 = por %p132, %p133
      %p136 = scmp.ne.s32.totalorder %s119, %s135
      %p137 = scmp.eq.s32.totalorder %s33, 0
      %p138 = por %p136, %p137
      %s140 = sadd.s32 %s139, 1
      %p143 = scmp.eq.s32.totalorder %s27, 1
      %p144 = scmp.ne.s32.totalorder %s139, %s141
      %p145 = scmp.eq.s32.totalorder %s27, 0
      %p146 = por %p144, %p145
      %p147 = scmp.ne.s32.totalorder %s139, %s141
      %p148 = scmp.eq.s32.totalorder %s32, 1
      %p149 = por %p147, %p148
      %p150 = scmp.ne.s32.totalorder %s141, %s142
      %p151 = scmp.eq.s32.totalorder %s32, 0
      %p152 = por %p150, %p151
      %p153 = scmp.ne.s32.totalorder %s141, %s142
      %p154 = scmp.eq.s32.totalorder %s33, 1
      %p155 = por %p153, %p154
      %p157 = scmp.ne.s32.totalorder %s142, %s156
      %p158 = scmp.eq.s32.totalorder %s33, 0
      %p159 = por %p157, %p158
      %s161 = sadd.s32 %s160, 1
      %p164 = scmp.eq.s32.totalorder %s27, 1
      %p165 = scmp.ne.s32.totalorder %s160, %s162
      %p166 = scmp.eq.s32.totalorder %s27, 0
      %p167 = por %p165, %p166
      %p168 = scmp.ne.s32.totalorder %s160, %s162
      %p169 = scmp.eq.s32.totalorder %s32, 1
      %p170 = por %p168, %p169
      %p171 = scmp.ne.s32.totalorder %s162, %s163
      %p172 = scmp.eq.s32.totalorder %s32, 0
      %p173 = por %p171, %p172
      %p174 = scmp.ne.s32.totalorder %s162, %s163
      %p175 = scmp.eq.s32.totalorder %s33, 1
      %p176 = por %p174, %p175
      %p178 = scmp.ne.s32.totalorder %s163, %s177
      %p179 = scmp.eq.s32.totalorder %s33, 0
      %p180 = por %p178, %p179
      %s182 = sadd.s32 %s181, 1
      %p185 = scmp.eq.s32.totalorder %s27, 1
      %p186 = scmp.ne.s32.totalorder %s181, %s183
      %p187 = scmp.eq.s32.totalorder %s27, 0
      %p188 = por %p186, %p187
      %p189 = scmp.ne.s32.totalorder %s181, %s183
      %p190 = scmp.eq.s32.totalorder %s32, 1
      %p191 = por %p189, %p190
      %p192 = scmp.ne.s32.totalorder %s183, %s184
      %p193 = scmp.eq.s32.totalorder %s32, 0
      %p194 = por %p192, %p193
      %p195 = scmp.ne.s32.totalorder %s183, %s184
      %p196 = scmp.eq.s32.totalorder %s33, 1
      %p197 = por %p195, %p196
      %p199 = scmp.ne.s32.totalorder %s184, %s198
      %p200 = scmp.eq.s32.totalorder %s33, 0
      %p201 = por %p199, %p200
      %s203 = sadd.s32 %s202, 1
      %p206 = scmp.eq.s32.totalorder %s27, 1
      %p207 = scmp.ne.s32.totalorder %s202, %s204
      %p208 = scmp.eq.s32.totalorder %s27, 0
      %p209 = por %p207, %p208
      %p210 = scmp.ne.s32.totalorder %s202, %s204
      %p211 = scmp.eq.s32.totalorder %s32, 1
      %p212 = por %p210, %p211
      %p213 = scmp.ne.s32.totalorder %s204, %s205
      %p214 = scmp.eq.s32.totalorder %s32, 0
      %p215 = por %p213, %p214
      %p216 = scmp.ne.s32.totalorder %s204, %s205
      %p217 = scmp.eq.s32.totalorder %s33, 1
      %p218 = por %p216, %p217
      %p220 = scmp.ne.s32.totalorder %s205, %s219
      %p221 = scmp.eq.s32.totalorder %s33, 0
      %p222 = por %p220, %p221
      %s223 = ssub.s32 %s27, %s34
      %p224 = scmp.eq.s32.totalorder %s223, 0
      %s226 = sadd.s32 %s225, 1
      %s227 = scalar_select %p224, %s225, %s226
      %p230 = pneg %p224
      %p231 = scmp.eq.s32.totalorder %s27, 1
      %p232 = por %p230, %p231
      %p233 = scmp.ne.s32.totalorder %s225, %s228
      %p234 = scmp.eq.s32.totalorder %s27, 0
      %p235 = por %p233, %p234
      %p236 = scmp.ne.s32.totalorder %s225, %s228
      %p237 = scmp.eq.s32.totalorder %s32, 1
      %p238 = por %p236, %p237
      %p239 = scmp.ne.s32.totalorder %s228, %s229
      %p240 = scmp.eq.s32.totalorder %s32, 0
      %p241 = por %p239, %p240
      %p242 = scmp.ne.s32.totalorder %s228, %s229
      %p243 = scmp.eq.s32.totalorder %s33, 1
      %p244 = por %p242, %p243
      %p246 = scmp.ne.s32.totalorder %s229, %s245
      %p247 = scmp.eq.s32.totalorder %s33, 0
      %p248 = por %p246, %p247
      %p249 = scmp.le.s32.totalorder 1, %s27
      %p250 = scmp.lt.s32.totalorder %s27, 3
      %p251 = pnand %p249, %p250
      %p252 = pneg %p251
      // Predicated region
      $region9: #{tpu_custom_call.1} parent=5 // pred_check
        _
      $region10: #{tpu_custom_call.1} parent=5 // pred_check_branch
        %254 = sbr.rel (%p251) target = $region12
      $region11: #{tpu_custom_call.1} parent=5 // pred_region
        %s255 = ssub.s32 %s27, 1
        // Predicated region
        $region13: #{tpu_custom_call.1} parent=11 // pred_check
          %p256 = pneg %p152
        $region14: #{tpu_custom_call.1} parent=11 // pred_check_branch
          %258 = sbr.rel (%p256) target = $region16
        $region15: #{tpu_custom_call.1} parent=11 // pred_region
          %260 = vsyncadd [#allocation10], 0
          %s261 = sshll.u32 %s4, 4
          %s262 = int_to_ptr.hbm [resolvable:$true] %s261
          %s263 = sshll.u32 [#allocation11], 4
          %s264 = int_to_ptr.vmem [resolvable:$true] %s263
          %269 = dma.hbm_to_vmem [thread:$0]  %s262, 768, %s264, [#allocation10], 64, 64, 4
        $region16: #{tpu_custom_call.1} parent=11 // pred_fallthru
          _
        // Predicated region
        $region17: #{tpu_custom_call.1} parent=11 // pred_check
          %p270 = pneg %p173
        $region18: #{tpu_custom_call.1} parent=11 // pred_check_branch
          %272 = sbr.rel (%p270) target = $region20
        $region19: #{tpu_custom_call.1} parent=11 // pred_region
          _
        $region20: #{tpu_custom_call.1} parent=11 // pred_fallthru
          _
        // Predicated region
        $region21: #{tpu_custom_call.1} parent=11 // pred_check
          %p273 = pneg %p194
        $region22: #{tpu_custom_call.1} parent=11 // pred_check_branch
          %275 = sbr.rel (%p273) target = $region24
        $region23: #{tpu_custom_call.1} parent=11 // pred_region
          %277 = vsyncadd [#allocation13], 0
          %s278 = sshll.u32 %s6, 4
          %s279 = int_to_ptr.hbm [resolvable:$true] %s278
          %s280 = sshll.u32 [#allocation12], 4
          %s281 = int_to_ptr.vmem [resolvable:$true] %s280
          %286 = dma.hbm_to_vmem [thread:$0]  %s279, 256, %s281, [#allocation13], 64, 64, 4
        $region24: #{tpu_custom_call.1} parent=11 // pred_fallthru
          _
        // Predicated region
        $region25: #{tpu_custom_call.1} parent=11 // pred_check
          %p287 = pneg %p215
        $region26: #{tpu_custom_call.1} parent=11 // pred_check_branch
          %289 = sbr.rel (%p287) target = $region28
        $region27: #{tpu_custom_call.1} parent=11 // pred_region
          _
        $region28: #{tpu_custom_call.1} parent=11 // pred_fallthru
          _
      $region12: #{tpu_custom_call.1} parent=5 // pred_fallthru
        _
      %p290 = scmp.lt.s32.totalorder %s27, 2
      // Predicated region
      $region29: #{tpu_custom_call.1} parent=5 // pred_check
        %p291 = pneg %p290
      $region30: #{tpu_custom_call.1} parent=5 // pred_check_branch
        %293 = sbr.rel (%p291) target = $region32
      $region31: #{tpu_custom_call.1} parent=5 // pred_region
        // Predicated region
        $region33: #{tpu_custom_call.1} parent=31 // pred_check
          %p294 = pneg %p47
        $region34: #{tpu_custom_call.1} parent=31 // pred_check_branch
          %296 = sbr.rel (%p294) target = $region36
        $region35: #{tpu_custom_call.1} parent=31 // pred_region
          %s297 = sand.u32 %s37, 1
          %s298 = scalar_lea.sflag [#allocation4], %s297
          %s299 = sand.u32 %s37, 1
          %s300 = smul.addr %s299, 4
          %s301 = scalar_lea.vmem [#allocation3], %s300
          %303 = vsyncadd %s298, 0
          %s304 = smul.addr %s27, 4
          %s305 = scalar_lea.hbm %s0, %s304
          %s307 = sshll.u32 %s305, 4
          %s308 = int_to_ptr.hbm [resolvable:$true] %s307
          %s309 = sshll.u32 %s301, 4
          %s310 = int_to_ptr.vmem [resolvable:$true] %s309
          %312 = dma.hbm_to_vmem [thread:$0]  %s308, 64, %s310, %s298
        $region36: #{tpu_custom_call.1} parent=31 // pred_fallthru
          _
        // Predicated region
        $region37: #{tpu_custom_call.1} parent=31 // pred_check
          %p313 = pneg %p73
        $region38: #{tpu_custom_call.1} parent=31 // pred_check_branch
          %315 = sbr.rel (%p313) target = $region40
        $region39: #{tpu_custom_call.1} parent=31 // pred_region
          %s316 = sand.u32 %s27, 1
          %s317 = scalar_lea.sflag [#allocation7], %s316
          %s318 = sand.u32 %s63, 1
          %s319 = smul.addr %s318, 4
          %s320 = scalar_lea.vmem [#allocation6], %s319
          %322 = vsyncadd %s317, 0
          %s323 = smul.addr %s27, 4
          %s324 = scalar_lea.hbm %s1, %s323
          %s326 = sshll.u32 %s324, 4
          %s327 = int_to_ptr.hbm [resolvable:$true] %s326
          %s328 = sshll.u32 %s320, 4
          %s329 = int_to_ptr.vmem [resolvable:$true] %s328
          %331 = dma.hbm_to_vmem [thread:$0]  %s327, 64, %s329, %s317
        $region40: #{tpu_custom_call.1} parent=31 // pred_fallthru
          _
        // Predicated region
        $region41: #{tpu_custom_call.1} parent=31 // pred_check
          %p332 = pneg %p99
        $region42: #{tpu_custom_call.1} parent=31 // pred_check_branch
          %334 = sbr.rel (%p332) target = $region44
        $region43: #{tpu_custom_call.1} parent=31 // pred_region
          %s335 = sand.u32 %s27, 1
          %s336 = scalar_lea.sflag [#allocation7], %s335
          %s337 = sand.u32 %s89, 1
          %s338 = smul.addr %s337, 4
          %s339 = scalar_lea.vmem [#allocation8], %s338
          %341 = vsyncadd %s336, 0
          %s342 = smul.addr %s27, 4
          %s343 = scalar_lea.hbm %s2, %s342
          %s345 = sshll.u32 %s343, 4
          %s346 = int_to_ptr.hbm [resolvable:$true] %s345
          %s347 = sshll.u32 %s339, 4
          %s348 = int_to_ptr.vmem [resolvable:$true] %s347
          %350 = dma.hbm_to_vmem [thread:$0]  %s346, 64, %s348, %s336
        $region44: #{tpu_custom_call.1} parent=31 // pred_fallthru
          _
        // Predicated region
        $region45: #{tpu_custom_call.1} parent=31 // pred_check
          %p351 = pneg %p125
        $region46: #{tpu_custom_call.1} parent=31 // pred_check_branch
          %353 = sbr.rel (%p351) target = $region48
        $region47: #{tpu_custom_call.1} parent=31 // pred_region
          %s354 = sand.u32 %s27, 1
          %s355 = scalar_lea.sflag [#allocation10], %s354
          %s356 = sand.u32 %s115, 1
          %s357 = smul.addr %s356, 8
          %s358 = scalar_lea.vmem [#allocation9], %s357
          %360 = vsyncadd %s355, 0
          %s361 = smul.addr %s27, 8
          %s362 = scalar_lea.hbm %s3, %s361
          %s364 = sshll.u32 %s362, 4
          %s365 = int_to_ptr.hbm [resolvable:$true] %s364
          %s366 = sshll.u32 %s358, 4
          %s367 = int_to_ptr.vmem [resolvable:$true] %s366
          %369 = dma.hbm_to_vmem [thread:$0]  %s365, 128, %s367, %s355
        $region48: #{tpu_custom_call.1} parent=31 // pred_fallthru
          _
      $region32: #{tpu_custom_call.1} parent=5 // pred_fallthru
        _
      %p370 = scmp.le.s32.totalorder 1, %s27
      %p371 = scmp.lt.s32.totalorder %s27, 3
      %p372 = pnand %p370, %p371
      %p373 = pneg %p372
      // Predicated region
      $region49: #{tpu_custom_call.1} parent=5 // pred_check
        _
      $region50: #{tpu_custom_call.1} parent=5 // pred_check_branch
        %375 = sbr.rel (%p372) target = $region52
      $region51: #{tpu_custom_call.1} parent=5 // pred_region
        %s376 = ssub.s32 %s27, 1
        %s377 = sand.u32 %s40, 1
        %s378 = scalar_lea.sflag [#allocation4], %s377
        %s379 = sand.u32 %s40, 1
        %s380 = smul.addr %s379, 4
        %s381 = scalar_lea.vmem [#allocation3], %s380
        // Predicated region
        $region53: #{tpu_custom_call.1} parent=51 // pred_check
          %p382 = pneg %p53
        $region54: #{tpu_custom_call.1} parent=51 // pred_check_branch
          %384 = sbr.rel (%p382) target = $region56
        $region55: #{tpu_custom_call.1} parent=51 // pred_region
          %386 = dma.done %s378, 64
        $region56: #{tpu_custom_call.1} parent=51 // pred_fallthru
          _
        %s387 = sand.u32 %s32, 1
        %s388 = scalar_lea.sflag [#allocation7], %s387
        %s389 = sand.u32 %s66, 1
        %s390 = smul.addr %s389, 4
        %s391 = scalar_lea.vmem [#allocation6], %s390
        // Predicated region
        $region57: #{tpu_custom_call.1} parent=51 // pred_check
          %p392 = pneg %p79
        $region58: #{tpu_custom_call.1} parent=51 // pred_check_branch
          %394 = sbr.rel (%p392) target = $region60
        $region59: #{tpu_custom_call.1} parent=51 // pred_region
          %396 = dma.done %s388, 64
        $region60: #{tpu_custom_call.1} parent=51 // pred_fallthru
          _
        %s397 = sand.u32 %s32, 1
        %s398 = scalar_lea.sflag [#allocation7], %s397
        %s399 = sand.u32 %s92, 1
        %s400 = smul.addr %s399, 4
        %s401 = scalar_lea.vmem [#allocation8], %s400
        // Predicated region
        $region61: #{tpu_custom_call.1} parent=51 // pred_check
          %p402 = pneg %p105
        $region62: #{tpu_custom_call.1} parent=51 // pred_check_branch
          %404 = sbr.rel (%p402) target = $region64
        $region63: #{tpu_custom_call.1} parent=51 // pred_region
          %406 = dma.done %s398, 64
        $region64: #{tpu_custom_call.1} parent=51 // pred_fallthru
          _
        %s407 = sand.u32 %s32, 1
        %s408 = scalar_lea.sflag [#allocation10], %s407
        %s409 = sand.u32 %s118, 1
        %s410 = smul.addr %s409, 8
        %s411 = scalar_lea.vmem [#allocation9], %s410
        // Predicated region
        $region65: #{tpu_custom_call.1} parent=51 // pred_check
          %p412 = pneg %p131
        $region66: #{tpu_custom_call.1} parent=51 // pred_check_branch
          %414 = sbr.rel (%p412) target = $region68
        $region67: #{tpu_custom_call.1} parent=51 // pred_region
          %416 = dma.done %s408, 128
        $region68: #{tpu_custom_call.1} parent=51 // pred_fallthru
          _
        // Predicated region
        $region69: #{tpu_custom_call.1} parent=51 // pred_check
          %p417 = pneg %p152
        $region70: #{tpu_custom_call.1} parent=51 // pred_check_branch
          %419 = sbr.rel (%p417) target = $region72
        $region71: #{tpu_custom_call.1} parent=51 // pred_region
          %421 = dma.done [#allocation10], 768
        $region72: #{tpu_custom_call.1} parent=51 // pred_fallthru
          _
        // Predicated region
        $region73: #{tpu_custom_call.1} parent=51 // pred_check
          %p422 = pneg %p194
        $region74: #{tpu_custom_call.1} parent=51 // pred_check_branch
          %424 = sbr.rel (%p422) target = $region76
        $region75: #{tpu_custom_call.1} parent=51 // pred_region
          %426 = dma.done [#allocation13], 256
        $region76: #{tpu_custom_call.1} parent=51 // pred_fallthru
          _
        %s427 = sand.u32 %s40, 1
        %s428 = scalar_lea.sflag [#allocation4], %s427
        %s429 = sand.u32 %s40, 1
        %s430 = smul.addr %s429, 4
        %s431 = scalar_lea.vmem [#allocation3], %s430
        %p432 = pneg %p53
        %p433 = pneg %p50
        %s434 = sand.u32 %s32, 1
        %s435 = scalar_lea.sflag [#allocation7], %s434
        %s436 = sand.u32 %s66, 1
        %s437 = smul.addr %s436, 4
        %s438 = scalar_lea.vmem [#allocation6], %s437
        %p439 = pneg %p79
        %p440 = pneg %p76
        %s441 = sand.u32 %s32, 1
        %s442 = scalar_lea.sflag [#allocation7], %s441
        %s443 = sand.u32 %s92, 1
        %s444 = smul.addr %s443, 4
        %s445 = scalar_lea.vmem [#allocation8], %s444
        %p446 = pneg %p105
        %p447 = pneg %p102
        %s448 = sand.u32 %s32, 1
        %s449 = scalar_lea.sflag [#allocation10], %s448
        %s450 = sand.u32 %s118, 1
        %s451 = smul.addr %s450, 8
        %s452 = scalar_lea.vmem [#allocation9], %s451
        %p453 = pneg %p131
        %p454 = pneg %p128
        %p455 = pneg %p152
        %p456 = pneg %p149
        %p457 = pneg %p173
        %p458 = pneg %p170
        %p459 = pneg %p194
        %p460 = pneg %p191
        %p461 = pneg %p215
        %p462 = pneg %p212
        %p463 = pneg %p241
        %p464 = pneg %p238
        %s465 = sand.u32 %s228, 1
        %s466 = scalar_lea.sflag [#allocation5], %s465
        %s467 = sand.u32 %s228, 1
        %s468 = smul.addr %s467, 8
        %s469 = scalar_lea.vmem [#allocation14], %s468
        %v471 = vld [vmem:[%s381] sm:$0xf]
        %v472 = vld [vmem:[%s391] sm:$0xf]
        %v473 = vld [vmem:[%s401] sm:$0xf]
        %v474 = vld [vmem:[#allocation11] sm:$0xf]
        %v475 = vld [vmem:[#allocation11 + $0x4] sm:$0xf]
        %v476 = vld [vmem:[#allocation11 + $0x8] sm:$0xf]
        %v477 = vld [vmem:[#allocation11 + $0xc] sm:$0xf]
        %v478 = vld [vmem:[%s5] sm:$0x1]
        %v480 = vperm.slane %v478, 0
        %v486 = vunpack.c.l.b16 %v474
        %v487 = vunpack.c.l.b16 %v475
        %v488 = vunpack.c.l.b16 %v476
        %v489 = vunpack.c.l.b16 %v477
        %v490 = vpack.c.b16 %v487, %v486
        %v491 = vpack.c.b16 %v489, %v488
        %vm494 = vcmask 261120
        %v496 = vsel %vm494, %v471, 0
        %498 = vmatpush.bf16.msra.mxu0 0
        %499 = vmatpush.bf16.msra.mxu0 0
        %500 = vmatpush.bf16.msra.mxu0 0
        %501 = vmatpush.bf16.msra.mxu0 0
        %502 = vmatpush.bf16.msra.mxu0 0
        %503 = vmatpush.bf16.msra.mxu0 0
        %504 = vmatpush.bf16.msra.mxu0 %v491
        %505 = vmatpush.bf16.msra.mxu0 %v490
        %506 = vmatmul.bf16.gmra.mxu0 %v496
        %v507 = vpop.f32.mrf.mxu0
        %v508 = vadd.f32 %v480, %v507
        %v509 = vpop.f32.mrf.mxu0
        %510 = vdwg.mxu0
        %v511 = vpack.c.bf16 %v508, %v508
        %s512 = scalar_lea.vmem [#allocation11], 16
        %v513 = vld [vmem:[%s512] sm:$0xf]
        %v514 = vld [vmem:[%s512 + $0x4] sm:$0xf]
        %v515 = vld [vmem:[%s512 + $0x8] sm:$0xf]
        %v516 = vld [vmem:[%s512 + $0xc] sm:$0xf]
        %s517 = scalar_lea.vmem %s5, 1
        %v518 = vld [vmem:[%s517] sm:$0x1]
        %v520 = vperm.slane %v518, 0
        %v526 = vunpack.c.l.b16 %v513
        %v527 = vunpack.c.l.b16 %v514
        %v528 = vunpack.c.l.b16 %v515
        %v529 = vunpack.c.l.b16 %v516
        %v530 = vpack.c.b16 %v527, %v526
        %v531 = vpack.c.b16 %v529, %v528
        %v535 = vsel %vm494, %v472, 0
        %537 = vmatpush.bf16.msra.mxu0 0
        %538 = vmatpush.bf16.msra.mxu0 0
        %539 = vmatpush.bf16.msra.mxu0 0
        %540 = vmatpush.bf16.msra.mxu0 0
        %541 = vmatpush.bf16.msra.mxu0 0
        %542 = vmatpush.bf16.msra.mxu0 0
        %543 = vmatpush.bf16.msra.mxu0 %v531
        %544 = vmatpush.bf16.msra.mxu0 %v530
        %545 = vmatmul.bf16.gmra.mxu0 %v535
        %v546 = vpop.f32.mrf.mxu0
        %v547 = vadd.f32 %v520, %v546
        %v548 = vpop.f32.mrf.mxu0
        %549 = vdwg.mxu0
        %v550 = vpack.c.bf16 %v547, %v547
        %s551 = scalar_lea.vmem [#allocation11], 32
        %v552 = vld [vmem:[%s551] sm:$0xf]
        %v553 = vld [vmem:[%s551 + $0x4] sm:$0xf]
        %v554 = vld [vmem:[%s551 + $0x8] sm:$0xf]
        %v555 = vld [vmem:[%s551 + $0xc] sm:$0xf]
        %s556 = scalar_lea.vmem %s5, 2
        %v557 = vld [vmem:[%s556] sm:$0x1]
        %v559 = vperm.slane %v557, 0
        %v565 = vunpack.c.l.b16 %v552
        %v566 = vunpack.c.l.b16 %v553
        %v567 = vunpack.c.l.b16 %v554
        %v568 = vunpack.c.l.b16 %v555
        %v569 = vpack.c.b16 %v566, %v565
        %v570 = vpack.c.b16 %v568, %v567
        %v574 = vsel %vm494, %v473, 0
        %576 = vmatpush.bf16.msra.mxu0 0
        %577 = vmatpush.bf16.msra.mxu0 0
        %578 = vmatpush.bf16.msra.mxu0 0
        %579 = vmatpush.bf16.msra.mxu0 0
        %580 = vmatpush.bf16.msra.mxu0 0
        %581 = vmatpush.bf16.msra.mxu0 0
        %582 = vmatpush.bf16.msra.mxu0 %v570
        %583 = vmatpush.bf16.msra.mxu0 %v569
        %584 = vmatmul.bf16.gmra.mxu0 %v574
        %v585 = vpop.f32.mrf.mxu0
        %v586 = vadd.f32 %v559, %v585
        %v587 = vpop.f32.mrf.mxu0
        %588 = vdwg.mxu0
        %v589 = vpack.c.bf16 %v586, %v586
        %v590 = vld [vmem:[%s411] sm:$0xff]
        %vm591 = vcmp.eq.f32.partialorder %v590, 0.0
        %vm592 = vcmask 64512
        %v594 = vsel %vm592, %v511, 0
        %v597 = vsel %vm592, %v550, 0
        %599 = vmatpush.bf16.xpose.msra.mxu0 0
        %600 = vmatpush.bf16.xpose.msra.mxu0 0
        %601 = vmatpush.bf16.xpose.msra.mxu0 0
        %602 = vmatpush.bf16.xpose.msra.mxu0 0
        %603 = vmatpush.bf16.xpose.msra.mxu0 0
        %604 = vmatpush.bf16.xpose.msra.mxu0 0
        %605 = vmatpush.bf16.xpose.msra.mxu0 0
        %606 = vmatpush.bf16.xpose.msra.mxu0 %v597
        %607 = vmatmul.bf16.gmra.mxu0 %v594
        %v608 = vpop.f32.mrf.mxu0
        %v609 = vadd.f32 0.0, %v608
        %v610 = vpop.f32.mrf.mxu0
        %611 = vdwg.mxu0
        %v612 = vsel %vm591, -1e+09, %v609
        %v613 = vsel %vm592, %v612, -inf
        %614 = vmax.xlane.f32.xlu0 %v613
        %v615 = vpop.xlane.xlu0 %614
        %v616 = vsub.f32 %v612, %v615
        %v617 = vmul.f32 %v616, 1.442695
        %v618 = vpow.pop %v617
        %v619 = vsel %vm592, %v618, 0.0
        %620 = vadd.xlane.f32.xlu0 %v619
        %v621 = vpop.xlane.xlu0 %620
        %v622 = vrcp.pop %v621
        %v623 = vmul.f32 %v618, %v622
        %v624 = vpack.c.bf16 %v623, %v623
        %v626 = vsel %vm592, %v624, 0
        %vm628 = vcmask 1043456
        %v630 = vsel %vm628, %v589, 0
        %632 = vmatpush.bf16.msra.mxu0 0
        %633 = vmatpush.bf16.msra.mxu0 0
        %634 = vmatpush.bf16.msra.mxu0 0
        %635 = vmatpush.bf16.msra.mxu0 0
        %636 = vmatpush.bf16.msra.mxu0 0
        %637 = vmatpush.bf16.msra.mxu0 0
        %638 = vmatpush.bf16.msra.mxu0 0
        %639 = vmatpush.bf16.msra.mxu0 %v630
        %640 = vmatmul.bf16.gmra.mxu0 %v626
        %v641 = vpop.f32.mrf.mxu0
        %v642 = vadd.f32 0.0, %v641
        %v643 = vpop.f32.mrf.mxu0
        %644 = vdwg.mxu0
        %v645 = vpack.c.bf16 %v642, %v642
        %vm646 = vcmask 60416
        %647 = vst.msk [vmem:[#allocation2] sm:$0xf] %vm646, %v645
        %v649 = vunpack.c.l.b16 %v511
        %v650 = vpack.c.b16 %v649, %v649
        %651 = vrot.lane.b32.xlu0 %v650, 120
        %v652 = vpop.permute.xlu0 %651
        %v654 = vunpack.c.l.b16 %v550
        %v655 = vpack.c.b16 %v654, %v654
        %656 = vrot.lane.b32.xlu0 %v655, 120
        %v657 = vpop.permute.xlu0 %656
        %v659 = vsel %vm592, %v652, 0
        %v662 = vsel %vm592, %v657, 0
        %664 = vmatpush.bf16.xpose.msra.mxu0 0
        %665 = vmatpush.bf16.xpose.msra.mxu0 0
        %666 = vmatpush.bf16.xpose.msra.mxu0 0
        %667 = vmatpush.bf16.xpose.msra.mxu0 0
        %668 = vmatpush.bf16.xpose.msra.mxu0 0
        %669 = vmatpush.bf16.xpose.msra.mxu0 0
        %670 = vmatpush.bf16.xpose.msra.mxu0 0
        %671 = vmatpush.bf16.xpose.msra.mxu0 %v662
        %672 = vmatmul.bf16.gmra.mxu0 %v659
        %v673 = vpop.f32.mrf.mxu0
        %v674 = vadd.f32 0.0, %v673
        %v675 = vpop.f32.mrf.mxu0
        %676 = vdwg.mxu0
        %v677 = vsel %vm591, -1e+09, %v674
        %v678 = vsel %vm592, %v677, -inf
        %679 = vmax.xlane.f32.xlu0 %v678
        %v680 = vpop.xlane.xlu0 %679
        %v681 = vsub.f32 %v677, %v680
        %v682 = vmul.f32 %v681, 1.442695
        %v683 = vpow.pop %v682
        %v684 = vsel %vm592, %v683, 0.0
        %685 = vadd.xlane.f32.xlu0 %v684
        %v686 = vpop.xlane.xlu0 %685
        %v687 = vrcp.pop %v686
        %v688 = vmul.f32 %v683, %v687
        %v689 = vpack.c.bf16 %v688, %v688
        %v691 = vunpack.c.l.b16 %v589
        %v692 = vpack.c.b16 %v691, %v691
        %693 = vrot.lane.b32.xlu0 %v692, 120
        %v694 = vpop.permute.xlu0 %693
        %v696 = vsel %vm592, %v689, 0
        %v699 = vsel %vm628, %v694, 0
        %701 = vmatpush.bf16.msra.mxu0 0
        %702 = vmatpush.bf16.msra.mxu0 0
        %703 = vmatpush.bf16.msra.mxu0 0
        %704 = vmatpush.bf16.msra.mxu0 0
        %705 = vmatpush.bf16.msra.mxu0 0
        %706 = vmatpush.bf16.msra.mxu0 0
        %707 = vmatpush.bf16.msra.mxu0 0
        %708 = vmatpush.bf16.msra.mxu0 %v699
        %709 = vmatmul.bf16.gmra.mxu0 %v696
        %v710 = vpop.f32.mrf.mxu0
        %v711 = vadd.f32 0.0, %v710
        %v712 = vpop.f32.mrf.mxu0
        %713 = vdwg.mxu0
        %v714 = vpack.c.bf16 %v711, %v711
        %716 = vrot.lane.b32.xlu0 %v714, 8
        %v717 = vpop.permute.xlu0 %716
        %vm719 = vcmask 126016
        %720 = vst.msk [vmem:[#allocation2] sm:$0xf] %vm719, %v717
        %721 = vrot.lane.b32.xlu0 %v650, 112
        %v722 = vpop.permute.xlu0 %721
        %723 = vrot.lane.b32.xlu0 %v655, 112
        %v724 = vpop.permute.xlu0 %723
        %v726 = vsel %vm592, %v722, 0
        %v729 = vsel %vm592, %v724, 0
        %731 = vmatpush.bf16.xpose.msra.mxu0 0
        %732 = vmatpush.bf16.xpose.msra.mxu0 0
        %733 = vmatpush.bf16.xpose.msra.mxu0 0
        %734 = vmatpush.bf16.xpose.msra.mxu0 0
        %735 = vmatpush.bf16.xpose.msra.mxu0 0
        %736 = vmatpush.bf16.xpose.msra.mxu0 0
        %737 = vmatpush.bf16.xpose.msra.mxu0 0
        %738 = vmatpush.bf16.xpose.msra.mxu0 %v729
        %739 = vmatmul.bf16.gmra.mxu0 %v726
        %v740 = vpop.f32.mrf.mxu0
        %v741 = vadd.f32 0.0, %v740
        %v742 = vpop.f32.mrf.mxu0
        %743 = vdwg.mxu0
        %v744 = vsel %vm591, -1e+09, %v741
        %v745 = vsel %vm592, %v744, -inf
        %746 = vmax.xlane.f32.xlu0 %v745
        %v747 = vpop.xlane.xlu0 %746
        %v748 = vsub.f32 %v744, %v747
        %v749 = vmul.f32 %v748, 1.442695
        %v750 = vpow.pop %v749
        %v751 = vsel %vm592, %v750, 0.0
        %752 = vadd.xlane.f32.xlu0 %v751
        %v753 = vpop.xlane.xlu0 %752
        %v754 = vrcp.pop %v753
        %v755 = vmul.f32 %v750, %v754
        %v756 = vpack.c.bf16 %v755, %v755
        %757 = vrot.lane.b32.xlu0 %v692, 112
        %v758 = vpop.permute.xlu0 %757
        %v760 = vsel %vm592, %v756, 0
        %v763 = vsel %vm628, %v758, 0
        %765 = vmatpush.bf16.msra.mxu0 0
        %766 = vmatpush.bf16.msra.mxu0 0
        %767 = vmatpush.bf16.msra.mxu0 0
        %768 = vmatpush.bf16.msra.mxu0 0
        %769 = vmatpush.bf16.msra.mxu0 0
        %770 = vmatpush.bf16.msra.mxu0 0
        %771 = vmatpush.bf16.msra.mxu0 0
        %772 = vmatpush.bf16.msra.mxu0 %v763
        %773 = vmatmul.bf16.gmra.mxu0 %v760
        %v774 = vpop.f32.mrf.mxu0
        %v775 = vadd.f32 0.0, %v774
        %v776 = vpop.f32.mrf.mxu0
        %777 = vdwg.mxu0
        %v778 = vpack.c.bf16 %v775, %v775
        %780 = vrot.lane.b32.xlu0 %v778, 16
        %v781 = vpop.permute.xlu0 %780
        %vm783 = vcmask 191616
        %784 = vst.msk [vmem:[#allocation2] sm:$0xf] %vm783, %v781
        %785 = vrot.lane.b32.xlu0 %v650, 104
        %v786 = vpop.permute.xlu0 %785
        %787 = vrot.lane.b32.xlu0 %v655, 104
        %v788 = vpop.permute.xlu0 %787
        %v790 = vsel %vm592, %v786, 0
        %v793 = vsel %vm592, %v788, 0
        %795 = vmatpush.bf16.xpose.msra.mxu0 0
        %796 = vmatpush.bf16.xpose.msra.mxu0 0
        %797 = vmatpush.bf16.xpose.msra.mxu0 0
        %798 = vmatpush.bf16.xpose.msra.mxu0 0
        %799 = vmatpush.bf16.xpose.msra.mxu0 0
        %800 = vmatpush.bf16.xpose.msra.mxu0 0
        %801 = vmatpush.bf16.xpose.msra.mxu0 0
        %802 = vmatpush.bf16.xpose.msra.mxu0 %v793
        %803 = vmatmul.bf16.gmra.mxu0 %v790
        %v804 = vpop.f32.mrf.mxu0
        %v805 = vadd.f32 0.0, %v804
        %v806 = vpop.f32.mrf.mxu0
        %807 = vdwg.mxu0
        %v808 = vsel %vm591, -1e+09, %v805
        %v809 = vsel %vm592, %v808, -inf
        %810 = vmax.xlane.f32.xlu0 %v809
        %v811 = vpop.xlane.xlu0 %810
        %v812 = vsub.f32 %v808, %v811
        %v813 = vmul.f32 %v812, 1.442695
        %v814 = vpow.pop %v813
        %v815 = vsel %vm592, %v814, 0.0
        %816 = vadd.xlane.f32.xlu0 %v815
        %v817 = vpop.xlane.xlu0 %816
        %v818 = vrcp.pop %v817
        %v819 = vmul.f32 %v814, %v818
        %v820 = vpack.c.bf16 %v819, %v819
        %821 = vrot.lane.b32.xlu0 %v692, 104
        %v822 = vpop.permute.xlu0 %821
        %v824 = vsel %vm592, %v820, 0
        %v827 = vsel %vm628, %v822, 0
        %829 = vmatpush.bf16.msra.mxu0 0
        %830 = vmatpush.bf16.msra.mxu0 0
        %831 = vmatpush.bf16.msra.mxu0 0
        %832 = vmatpush.bf16.msra.mxu0 0
        %833 = vmatpush.bf16.msra.mxu0 0
        %834 = vmatpush.bf16.msra.mxu0 0
        %835 = vmatpush.bf16.msra.mxu0 0
        %836 = vmatpush.bf16.msra.mxu0 %v827
        %837 = vmatmul.bf16.gmra.mxu0 %v824
        %v838 = vpop.f32.mrf.mxu0
        %v839 = vadd.f32 0.0, %v838
        %v840 = vpop.f32.mrf.mxu0
        %841 = vdwg.mxu0
        %v842 = vpack.c.bf16 %v839, %v839
        %844 = vrot.lane.b32.xlu0 %v842, 24
        %v845 = vpop.permute.xlu0 %844
        %vm847 = vcmask 257216
        %848 = vst.msk [vmem:[#allocation2] sm:$0xf] %vm847, %v845
        %v849 = vld [vmem:[#allocation2] sm:$0xf]
        %v850 = vld [vmem:[#allocation12] sm:$0xf]
        %v851 = vld [vmem:[#allocation12 + $0x4] sm:$0xf]
        %v852 = vld [vmem:[#allocation12 + $0x8] sm:$0xf]
        %v853 = vld [vmem:[#allocation12 + $0xc] sm:$0xf]
        %v854 = vld [vmem:[%s7] sm:$0x1]
        %v856 = vperm.slane %v854, 0
        %v862 = vunpack.c.l.b16 %v850
        %v863 = vunpack.c.l.b16 %v851
        %v864 = vunpack.c.l.b16 %v852
        %v865 = vunpack.c.l.b16 %v853
        %v866 = vpack.c.b16 %v863, %v862
        %v867 = vpack.c.b16 %v865, %v864
        %v871 = vsel %vm494, %v849, 0
        %873 = vmatpush.bf16.msra.mxu0 0
        %874 = vmatpush.bf16.msra.mxu0 0
        %875 = vmatpush.bf16.msra.mxu0 0
        %876 = vmatpush.bf16.msra.mxu0 0
        %877 = vmatpush.bf16.msra.mxu0 0
        %878 = vmatpush.bf16.msra.mxu0 0
        %879 = vmatpush.bf16.msra.mxu0 %v867
        %880 = vmatpush.bf16.msra.mxu0 %v866
        %881 = vmatmul.bf16.gmra.mxu0 %v871
        %v882 = vpop.f32.mrf.mxu0
        %v883 = vadd.f32 %v856, %v882
        %v884 = vpop.f32.mrf.mxu0
        %885 = vdwg.mxu0
        %886 = vst.msk [vmem:[%s469] sm:$0xff] %vm494, %v883
        %s887 = sand.u32 %s228, 1
        %s888 = scalar_lea.sflag [#allocation5], %s887
        %s889 = sand.u32 %s228, 1
        %s890 = smul.addr %s889, 8
        %s891 = scalar_lea.vmem [#allocation14], %s890
        // Predicated region
        $region77: #{tpu_custom_call.1} parent=51 // pred_check
          %p892 = pneg %p238
        $region78: #{tpu_custom_call.1} parent=51 // pred_check_branch
          %894 = sbr.rel (%p892) target = $region80
        $region79: #{tpu_custom_call.1} parent=51 // pred_region
          %896 = vsyncadd %s888, 0
          %s897 = smul.addr %s32, 8
          %s898 = scalar_lea.hbm %s8, %s897
          %s900 = sshll.u32 %s891, 4
          %s901 = int_to_ptr.vmem [resolvable:$true] %s900
          %s902 = sshll.u32 %s898, 4
          %s903 = int_to_ptr.hbm [resolvable:$true] %s902
          %905 = dma.vmem_to_hbm [thread:$0]  %s901, 128, %s903, %s888
        $region80: #{tpu_custom_call.1} parent=51 // pred_fallthru
          _
      $region52: #{tpu_custom_call.1} parent=5 // pred_fallthru
        _
      %p906 = scmp.le.s32.totalorder 2, %s27
      // Predicated region
      $region81: #{tpu_custom_call.1} parent=5 // pred_check
        %p907 = pneg %p906
      $region82: #{tpu_custom_call.1} parent=5 // pred_check_branch
        %909 = sbr.rel (%p907) target = $region84
      $region83: #{tpu_custom_call.1} parent=5 // pred_region
        %s910 = ssub.s32 %s27, 2
        // Predicated region
        $region85: #{tpu_custom_call.1} parent=83 // pred_check
          %p911 = pneg %p244
        $region86: #{tpu_custom_call.1} parent=83 // pred_check_branch
          %913 = sbr.rel (%p911) target = $region88
        $region87: #{tpu_custom_call.1} parent=83 // pred_region
          %s914 = sand.u32 %s229, 1
          %s915 = scalar_lea.sflag [#allocation5], %s914
          %s916 = sand.u32 %s229, 1
          %s917 = smul.addr %s916, 8
          %s918 = scalar_lea.vmem [#allocation14], %s917
          %920 = dma.done %s915, 128
        $region88: #{tpu_custom_call.1} parent=83 // pred_fallthru
          _
      $region84: #{tpu_custom_call.1} parent=5 // pred_fallthru
        _
    $region6: #{tpu_custom_call.1} parent=1 // loop_footer
      %s31 = sadd.s32 1, %s27
    $region7: #{tpu_custom_call.1} parent=1 // loop_footer_branch
      %26 = sbr.rel target = $region3
    $region8: #{tpu_custom_call.1} parent=1 // loop_exit
      _
    %921 = vsyncpa [#allocation4], 1
    %s922 = scalar_lea.sflag [#allocation4], 1
    %923 = vsyncpa %s922, 1
    %924 = vsyncpa [#allocation7], 1
    %s925 = scalar_lea.sflag [#allocation7], 1
    %926 = vsyncpa %s925, 1
    %927 = vsyncpa [#allocation10], 1
    %s928 = scalar_lea.sflag [#allocation10], 1
    %929 = vsyncpa %s928, 1
    %930 = vsyncpa [#allocation13], 1
    %931 = vsyncpa [#allocation5], 1
    %s932 = scalar_lea.sflag [#allocation5], 1
    %933 = vsyncpa %s932, 1

</llo_original>
